<compile_context>
chip_gen: v7x
topology: tpu7x:2x2x1
jax: 0.10.0
libtpu: 0.0.40
codegen_flags: <defaults>
</compile_context>

<pallas_src>
import functools

import jax
import jax.numpy as jnp
from jax import lax
from jax.experimental import pallas as pl
from jax.experimental.pallas import tpu as pltpu


def _recon_kernel(dr_ref, di_ref, xr_ref, xi_ref, invd_ref,
                  fh_ref, fw_ref, gh_ref, gw_ref,
                  or_ref, oi_ref, *, tb, matmul_dtype):
    """One grid step = TB complex (H, W) slices, processed slice-by-slice.

    fh_ref = [cos_H,  sin_H,  cos_H+sin_H]                 forward left  (F_H)
    fw_ref = rho * [cos_W, sin_W, cos_W+sin_W]             forward right (rho*F_W)
    gh_ref = [cos_H, -sin_H,  cos_H-sin_H]                 inverse left  (conj F_H)
    gw_ref = [cos_W, -sin_W,  cos_W-sin_W] / (H*W)         inverse right (conj F_W / HW)
    invd_ref = 1 / where(mask+rho==0, 1e-6, mask+rho)
    """
    f32 = jnp.float32
    mt = matmul_dtype

    # Constant planes: loaded once per grid step (stored in matmul_dtype already).
    fhr, fhi, fhs = fh_ref[0], fh_ref[1], fh_ref[2]
    fwr, fwi, fws = fw_ref[0], fw_ref[1], fw_ref[2]
    ghr, ghi, ghs = gh_ref[0], gh_ref[1], gh_ref[2]
    gwr, gwi, gws = gw_ref[0], gw_ref[1], gw_ref[2]
    invd = invd_ref[...]                                   # (H, W) f32

    # Gauss 3-mult complex matmuls: elementwise sums in f32, operands cast late.
    def cmm_left(mr, mi, ms, xr, xi):                      # (M_r + i M_i) @ (x_r + i x_i)
        m1 = jnp.dot(mr, xr.astype(mt), preferred_element_type=f32)
        m2 = jnp.dot(mi, xi.astype(mt), preferred_element_type=f32)
        m3 = jnp.dot(ms, (xr + xi).astype(mt), preferred_element_type=f32)
        return m1 - m2, m3 - m1 - m2

    def cmm_right(xr, xi, mr, mi, ms):                     # (x_r + i x_i) @ (M_r + i M_i)
        m1 = jnp.dot(xr.astype(mt), mr, preferred_element_type=f32)
        m2 = jnp.dot(xi.astype(mt), mi, preferred_element_type=f32)
        m3 = jnp.dot((xr + xi).astype(mt), ms, preferred_element_type=f32)
        return m1 - m2, m3 - m1 - m2

    def slice_body(b, carry):
        dr = dr_ref[b]                                     # (H, W) f32
        di = di_ref[b]
        # rho * fft2(d) = F_H @ (d @ (rho * F_W))
        ar, ai = cmm_right(dr, di, fwr, fwi, fws)
        tr, ti = cmm_left(fhr, fhi, fhs, ar, ai)
        # (input + rho*fft2(d)) / denom    (denom is real -> scale both planes)
        vr = (xr_ref[b] + tr) * invd
        vi = (xi_ref[b] + ti) * invd
        # ifft2(v) = conj(F_H) @ (v @ conj(F_W)/(H*W))
        ur, ui = cmm_right(vr, vi, gwr, gwi, gws)
        zr, zi = cmm_left(ghr, ghi, ghs, ur, ui)
        or_ref[b] = zr
        oi_ref[b] = zi
        return carry

    lax.fori_loop(0, tb, slice_body, 0, unroll=(tb <= 4))


def _dft_planes(n):
    """cos/sin planes of the n x n DFT matrix exp(-2*pi*i*k*m/n) (exact phase mod)."""
    k = jnp.arange(n, dtype=jnp.int32)
    km = (k[:, None] * k[None, :]) % n
    ang = (-2.0 * jnp.pi / n) * km.astype(jnp.float32)
    return jnp.cos(ang), jnp.sin(ang)


def _vmem_capacity_bytes():
    try:
        return int(pltpu.get_tpu_info().vmem_capacity_bytes)
    except Exception:                       # conservative fallback (v7x per-core size)
        return 64 * 1024 * 1024


def _vmem_budgets(vmem_capacity):
    """(tiling budget, vmem_limit_bytes) for the current TPU generation."""
    if vmem_capacity >= 96 * 1024 * 1024:   # v5e / v6e: 128 MiB per core
        return 64 * 1024 * 1024, 100 * 1024 * 1024
    return 22 * 1024 * 1024, 56 * 1024 * 1024  # v7x-class: 64 MiB per core


def _choose_tb(bc, h, w, tile_budget):
    """Largest divisor of bc fitting the budget, preferring >= 4 grid steps
    (>= 2 per v7x core; DMA/compute overlap on single-core v5e/v6e)."""
    const_bytes = 2 * (6 * h * h + 6 * w * w + h * w) * 4   # buffers + loaded copies
    temp_bytes = 16 * h * w * 4                              # per-slice matmul temps
    per_slice = 6 * 2 * h * w * 4                            # 6 I/O planes, double-buffered
    avail = max(tile_budget - const_bytes - temp_bytes, per_slice)
    cap = max(1, avail // per_slice)
    fits = [d for d in range(1, bc + 1) if bc % d == 0 and d <= cap]
    if not fits:
        fits = [1]
    for min_steps in (4, 2, 1):
        pref = [d for d in fits if bc // d >= min_steps]
        if pref:
            return max(pref)
    return 1


def _const_spec(shape):
    """Single-buffered BlockSpec for a grid-invariant constant."""
    index_map = lambda b: (0,) * len(shape)
    try:
        return pl.BlockSpec(shape, index_map, pipeline_mode=pl.Buffered(1))
    except Exception:   # older BlockSpec without pipeline_mode — fall back to default
        return pl.BlockSpec(shape, index_map)


class ReconstructionFinalLayerPallas:
    def __init__(self, rho, mask, matmul_dtype=jnp.float32):
        # matmul_dtype=jnp.bfloat16 trades DFT accuracy for MXU rate; validate per size.
        self.rho = float(rho)
        self.matmul_dtype = matmul_dtype
        mask = jnp.asarray(mask, jnp.float32)
        if mask.ndim != 2:
            raise ValueError("mask must be (H, W)")
        self.mask = mask
        H, W = mask.shape
        self._hw = (H, W)

        # --- hoisted per-call constants (computed once) ---
        denom = mask + self.rho
        denom = jnp.where(denom == 0.0, jnp.float32(1e-6), denom)
        self.inv_denom = (1.0 / denom).astype(jnp.float32)

        ch, sh = _dft_planes(H)
        cw, sw = _dft_planes(W)
        rho_f = jnp.float32(self.rho)
        hw_inv = jnp.float32(1.0 / (H * W))
        md = matmul_dtype
        self.fh = jnp.stack([ch, sh, ch + sh]).astype(md)                               # F_H
        self.fw = jnp.stack([rho_f * cw, rho_f * sw, rho_f * (cw + sw)]).astype(md)     # rho*F_W
        self.gh = jnp.stack([ch, -sh, ch - sh]).astype(md)                              # conj(F_H)
        self.gw = jnp.stack([hw_inv * cw, -hw_inv * sw, hw_inv * (cw - sw)]).astype(md) # conj(F_W)/HW

        self._tile_budget, self._vmem_limit = _vmem_budgets(_vmem_capacity_bytes())
        self._forward = jax.jit(self._forward_impl)

    def _forward_impl(self, minus, multi, inp):
        B, C, H, W = inp.shape
        assert (H, W) == self._hw, "mask / input spatial shape mismatch"
        BC = B * C

        # Fold (minus - multi) into the real/imag split: 4 kernel input planes, not 6.
        d = (minus - multi).reshape(BC, H, W)
        d_r = jnp.real(d).astype(jnp.float32)
        d_i = jnp.imag(d).astype(jnp.float32)
        z = inp.reshape(BC, H, W)
        in_r = jnp.real(z).astype(jnp.float32)
        in_i = jnp.imag(z).astype(jnp.float32)

        tb = _choose_tb(BC, H, W, self._tile_budget)
        grid = (BC // tb,)

        # TODO(synk): if acquisition W is not a multiple of 128 (H of 8), padding the
        # spatial dims here would make output stores lane-dense; only worth it if the
        # masked-store cost exceeds the extra FLOPs at the production shape.

        data_spec = pl.BlockSpec((tb, H, W), lambda b: (b, 0, 0))
        invd_spec = _const_spec((H, W))
        fh_spec = _const_spec((3, H, H))
        fw_spec = _const_spec((3, W, W))

        kernel = functools.partial(_recon_kernel, tb=tb,
                                   matmul_dtype=self.matmul_dtype)

        out_r, out_i = pl.pallas_call(
            kernel,
            grid=grid,
            in_specs=[data_spec, data_spec,      # d = minus - multi   (r / i)
                      data_spec, data_spec,      # input               (r / i)
                      invd_spec,                 # 1 / denom
                      fh_spec, fw_spec,          # forward DFT (rho folded)
                      fh_spec, fw_spec],         # inverse DFT (conj, 1/HW folded)
            out_specs=[data_spec, data_spec],
            out_shape=[jax.ShapeDtypeStruct((BC, H, W), jnp.float32),
                       jax.ShapeDtypeStruct((BC, H, W), jnp.float32)],
            compiler_params=pltpu.CompilerParams(
                dimension_semantics=("parallel",),
                vmem_limit_bytes=self._vmem_limit),
        )(d_r, d_i, in_r, in_i, self.inv_denom, self.fh, self.fw, self.gh, self.gw)

        return lax.complex(out_r, out_i).astype(jnp.complex64).reshape(B, C, H, W)

    def __call__(self, x):
        out = self._forward(
            jnp.asarray(x['minus_output'], jnp.complex64),
            jnp.asarray(x['multi_output'], jnp.complex64),
            jnp.asarray(x['input'], jnp.complex64))
        x['re_final_output'] = out
        return x['re_final_output']


def _reference(x, rho, mask):
    minus = x['minus_output']
    multi = x['multi_output']
    inp = x['input']
    number = inp + rho * jnp.fft.fft2(minus - multi)
    denom = mask.astype(jnp.complex64) + rho
    denom = jnp.where(denom == 0, jnp.complex64(1e-6), denom)
    return jnp.fft.ifft2(number / denom)


if __name__ == "__main__":
    B, C, H, W = 2, 4, 16, 16
    key = jax.random.PRNGKey(0)
    k1, k2, k3, k4, k5, k6, k7 = jax.random.split(key, 7)

    def cplx(ka, kb):
        return (jax.random.normal(ka, (B, C, H, W), jnp.float32)
                + 1j * jax.random.normal(kb, (B, C, H, W), jnp.float32)
                ).astype(jnp.complex64)

    x = {
        'minus_output': cplx(k1, k2),
        'multi_output': cplx(k3, k4),
        'input': cplx(k5, k6),
    }
    mask = (jax.random.uniform(k7, (H, W)) > 0.5).astype(jnp.float32)
    rho = 0.5

    layer = ReconstructionFinalLayerPallas(rho, mask)
    out = layer(dict(x))
    out = jax.block_until_ready(out)

    ref = _reference(x, rho, mask)
    err = float(jnp.max(jnp.abs(out - ref)))
    # f32 MXU matmuls + Gauss 3-mult recombination leave a small numerical gap vs.
    # the float FFT reference; anything structurally wrong would be O(1) or larger.
    assert err < 2e-2, f"max abs error too large: {err}"
    print("KERNEL_OK")
</pallas_src>

<mosaic_0001>
module attributes {stable_mosaic.version = 11 : i64} {
  func.func @_recon_kernel(%arg0: i32, %arg1: memref<2x16x16xf32, #tpu.memory_space<vmem>>, %arg2: memref<2x16x16xf32, #tpu.memory_space<vmem>>, %arg3: memref<2x16x16xf32, #tpu.memory_space<vmem>>, %arg4: memref<2x16x16xf32, #tpu.memory_space<vmem>>, %arg5: memref<16x16xf32, #tpu.memory_space<vmem>>, %arg6: memref<3x16x16xf32, #tpu.memory_space<vmem>>, %arg7: memref<3x16x16xf32, #tpu.memory_space<vmem>>, %arg8: memref<3x16x16xf32, #tpu.memory_space<vmem>>, %arg9: memref<3x16x16xf32, #tpu.memory_space<vmem>>, %arg10: memref<2x16x16xf32, #tpu.memory_space<vmem>>, %arg11: memref<2x16x16xf32, #tpu.memory_space<vmem>>) attributes {dimension_semantics = [#tpu.dimension_semantics<parallel>], iteration_bounds = array<i64: 4>, scalar_prefetch = 0 : i64, scratch_operands = 0 : i64, tpu.core_type = #tpu.core_type<tc>, window_params = [{transform_indices = @transform_0, window_bounds = array<i64: 2, 16, 16>}, {transform_indices = @transform_1, window_bounds = array<i64: 2, 16, 16>}, {transform_indices = @transform_2, window_bounds = array<i64: 2, 16, 16>}, {transform_indices = @transform_3, window_bounds = array<i64: 2, 16, 16>}, {pipeline_mode = #tpu.pipeline_mode<synchronous>, transform_indices = @transform_4, window_bounds = array<i64: 16, 16>}, {pipeline_mode = #tpu.pipeline_mode<synchronous>, transform_indices = @transform_5, window_bounds = array<i64: 3, 16, 16>}, {pipeline_mode = #tpu.pipeline_mode<synchronous>, transform_indices = @transform_6, window_bounds = array<i64: 3, 16, 16>}, {pipeline_mode = #tpu.pipeline_mode<synchronous>, transform_indices = @transform_7, window_bounds = array<i64: 3, 16, 16>}, {pipeline_mode = #tpu.pipeline_mode<synchronous>, transform_indices = @transform_8, window_bounds = array<i64: 3, 16, 16>}, {transform_indices = @transform_9, window_bounds = array<i64: 2, 16, 16>}, {transform_indices = @transform_10, window_bounds = array<i64: 2, 16, 16>}]} {
    %c0 = arith.constant 0 : index
    %c0_0 = arith.constant 0 : index
    %c0_1 = arith.constant 0 : index
    %0 = vector.load %arg6[%c0, %c0_0, %c0_1] : memref<3x16x16xf32, #tpu.memory_space<vmem>>, vector<1x16x16xf32>
    %1 = vector.shape_cast %0 : vector<1x16x16xf32> to vector<16x16xf32>
    %c1 = arith.constant 1 : index
    %c0_2 = arith.constant 0 : index
    %c0_3 = arith.constant 0 : index
    %2 = vector.load %arg6[%c1, %c0_2, %c0_3] : memref<3x16x16xf32, #tpu.memory_space<vmem>>, vector<1x16x16xf32>
    %3 = vector.shape_cast %2 : vector<1x16x16xf32> to vector<16x16xf32>
    %c2 = arith.constant 2 : index
    %c0_4 = arith.constant 0 : index
    %c0_5 = arith.constant 0 : index
    %4 = vector.load %arg6[%c2, %c0_4, %c0_5] : memref<3x16x16xf32, #tpu.memory_space<vmem>>, vector<1x16x16xf32>
    %5 = vector.shape_cast %4 : vector<1x16x16xf32> to vector<16x16xf32>
    %c0_6 = arith.constant 0 : index
    %c0_7 = arith.constant 0 : index
    %c0_8 = arith.constant 0 : index
    %6 = vector.load %arg7[%c0_6, %c0_7, %c0_8] : memref<3x16x16xf32, #tpu.memory_space<vmem>>, vector<1x16x16xf32>
    %7 = vector.shape_cast %6 : vector<1x16x16xf32> to vector<16x16xf32>
    %c1_9 = arith.constant 1 : index
    %c0_10 = arith.constant 0 : index
    %c0_11 = arith.constant 0 : index
    %8 = vector.load %arg7[%c1_9, %c0_10, %c0_11] : memref<3x16x16xf32, #tpu.memory_space<vmem>>, vector<1x16x16xf32>
    %9 = vector.shape_cast %8 : vector<1x16x16xf32> to vector<16x16xf32>
    %c2_12 = arith.constant 2 : index
    %c0_13 = arith.constant 0 : index
    %c0_14 = arith.constant 0 : index
    %10 = vector.load %arg7[%c2_12, %c0_13, %c0_14] : memref<3x16x16xf32, #tpu.memory_space<vmem>>, vector<1x16x16xf32>
    %11 = vector.shape_cast %10 : vector<1x16x16xf32> to vector<16x16xf32>
    %c0_15 = arith.constant 0 : index
    %c0_16 = arith.constant 0 : index
    %c0_17 = arith.constant 0 : index
    %12 = vector.load %arg8[%c0_15, %c0_16, %c0_17] : memref<3x16x16xf32, #tpu.memory_space<vmem>>, vector<1x16x16xf32>
    %13 = vector.shape_cast %12 : vector<1x16x16xf32> to vector<16x16xf32>
    %c1_18 = arith.constant 1 : index
    %c0_19 = arith.constant 0 : index
    %c0_20 = arith.constant 0 : index
    %14 = vector.load %arg8[%c1_18, %c0_19, %c0_20] : memref<3x16x16xf32, #tpu.memory_space<vmem>>, vector<1x16x16xf32>
    %15 = vector.shape_cast %14 : vector<1x16x16xf32> to vector<16x16xf32>
    %c2_21 = arith.constant 2 : index
    %c0_22 = arith.constant 0 : index
    %c0_23 = arith.constant 0 : index
    %16 = vector.load %arg8[%c2_21, %c0_22, %c0_23] : memref<3x16x16xf32, #tpu.memory_space<vmem>>, vector<1x16x16xf32>
    %17 = vector.shape_cast %16 : vector<1x16x16xf32> to vector<16x16xf32>
    %c0_24 = arith.constant 0 : index
    %c0_25 = arith.constant 0 : index
    %c0_26 = arith.constant 0 : index
    %18 = vector.load %arg9[%c0_24, %c0_25, %c0_26] : memref<3x16x16xf32, #tpu.memory_space<vmem>>, vector<1x16x16xf32>
    %19 = vector.shape_cast %18 : vector<1x16x16xf32> to vector<16x16xf32>
    %c1_27 = arith.constant 1 : index
    %c0_28 = arith.constant 0 : index
    %c0_29 = arith.constant 0 : index
    %20 = vector.load %arg9[%c1_27, %c0_28, %c0_29] : memref<3x16x16xf32, #tpu.memory_space<vmem>>, vector<1x16x16xf32>
    %21 = vector.shape_cast %20 : vector<1x16x16xf32> to vector<16x16xf32>
    %c2_30 = arith.constant 2 : index
    %c0_31 = arith.constant 0 : index
    %c0_32 = arith.constant 0 : index
    %22 = vector.load %arg9[%c2_30, %c0_31, %c0_32] : memref<3x16x16xf32, #tpu.memory_space<vmem>>, vector<1x16x16xf32>
    %23 = vector.shape_cast %22 : vector<1x16x16xf32> to vector<16x16xf32>
    %c0_33 = arith.constant 0 : index
    %c0_34 = arith.constant 0 : index
    %24 = vector.load %arg5[%c0_33, %c0_34] : memref<16x16xf32, #tpu.memory_space<vmem>>, vector<16x16xf32>
    %c0_i32 = arith.constant 0 : i32
    %25 = arith.index_cast %c0_i32 : i32 to index
    %c0_35 = arith.constant 0 : index
    %c0_36 = arith.constant 0 : index
    %26 = vector.load %arg1[%25, %c0_35, %c0_36] : memref<2x16x16xf32, #tpu.memory_space<vmem>>, vector<1x16x16xf32>
    %27 = vector.shape_cast %26 : vector<1x16x16xf32> to vector<16x16xf32>
    %28 = arith.index_cast %c0_i32 : i32 to index
    %c0_37 = arith.constant 0 : index
    %c0_38 = arith.constant 0 : index
    %29 = vector.load %arg2[%28, %c0_37, %c0_38] : memref<2x16x16xf32, #tpu.memory_space<vmem>>, vector<1x16x16xf32>
    %30 = vector.shape_cast %29 : vector<1x16x16xf32> to vector<16x16xf32>
    %cst = arith.constant dense<0.000000e+00> : vector<16x16xf32>
    %31 = tpu.matmul %27, %7, %cst {dimension_numbers = #tpu.dot_dimension_numbers<[1], [0], [0], [1], [0, 0, 1, 1], [], []>} : vector<16x16xf32>, vector<16x16xf32>, vector<16x16xf32> -> vector<16x16xf32>
    %cst_39 = arith.constant dense<0.000000e+00> : vector<16x16xf32>
    %32 = tpu.matmul %30, %9, %cst_39 {dimension_numbers = #tpu.dot_dimension_numbers<[1], [0], [0], [1], [0, 0, 1, 1], [], []>} : vector<16x16xf32>, vector<16x16xf32>, vector<16x16xf32> -> vector<16x16xf32>
    %33 = arith.addf %27, %30 : vector<16x16xf32>
    %cst_40 = arith.constant dense<0.000000e+00> : vector<16x16xf32>
    %34 = tpu.matmul %33, %11, %cst_40 {dimension_numbers = #tpu.dot_dimension_numbers<[1], [0], [0], [1], [0, 0, 1, 1], [], []>} : vector<16x16xf32>, vector<16x16xf32>, vector<16x16xf32> -> vector<16x16xf32>
    %35 = arith.subf %31, %32 : vector<16x16xf32>
    %36 = arith.subf %34, %31 : vector<16x16xf32>
    %37 = arith.subf %36, %32 : vector<16x16xf32>
    %cst_41 = arith.constant dense<0.000000e+00> : vector<16x16xf32>
    %38 = tpu.matmul %1, %35, %cst_41 {dimension_numbers = #tpu.dot_dimension_numbers<[1], [0], [0], [1], [0, 0, 1, 1], [], []>} : vector<16x16xf32>, vector<16x16xf32>, vector<16x16xf32> -> vector<16x16xf32>
    %cst_42 = arith.constant dense<0.000000e+00> : vector<16x16xf32>
    %39 = tpu.matmul %3, %37, %cst_42 {dimension_numbers = #tpu.dot_dimension_numbers<[1], [0], [0], [1], [0, 0, 1, 1], [], []>} : vector<16x16xf32>, vector<16x16xf32>, vector<16x16xf32> -> vector<16x16xf32>
    %40 = arith.addf %35, %37 : vector<16x16xf32>
    %cst_43 = arith.constant dense<0.000000e+00> : vector<16x16xf32>
    %41 = tpu.matmul %5, %40, %cst_43 {dimension_numbers = #tpu.dot_dimension_numbers<[1], [0], [0], [1], [0, 0, 1, 1], [], []>} : vector<16x16xf32>, vector<16x16xf32>, vector<16x16xf32> -> vector<16x16xf32>
    %42 = arith.subf %38, %39 : vector<16x16xf32>
    %43 = arith.subf %41, %38 : vector<16x16xf32>
    %44 = arith.subf %43, %39 : vector<16x16xf32>
    %45 = arith.index_cast %c0_i32 : i32 to index
    %c0_44 = arith.constant 0 : index
    %c0_45 = arith.constant 0 : index
    %46 = vector.load %arg3[%45, %c0_44, %c0_45] : memref<2x16x16xf32, #tpu.memory_space<vmem>>, vector<1x16x16xf32>
    %47 = vector.shape_cast %46 : vector<1x16x16xf32> to vector<16x16xf32>
    %48 = arith.addf %47, %42 : vector<16x16xf32>
    %49 = arith.mulf %48, %24 : vector<16x16xf32>
    %50 = arith.index_cast %c0_i32 : i32 to index
    %c0_46 = arith.constant 0 : index
    %c0_47 = arith.constant 0 : index
    %51 = vector.load %arg4[%50, %c0_46, %c0_47] : memref<2x16x16xf32, #tpu.memory_space<vmem>>, vector<1x16x16xf32>
    %52 = vector.shape_cast %51 : vector<1x16x16xf32> to vector<16x16xf32>
    %53 = arith.addf %52, %44 : vector<16x16xf32>
    %54 = arith.mulf %53, %24 : vector<16x16xf32>
    %cst_48 = arith.constant dense<0.000000e+00> : vector<16x16xf32>
    %55 = tpu.matmul %49, %19, %cst_48 {dimension_numbers = #tpu.dot_dimension_numbers<[1], [0], [0], [1], [0, 0, 1, 1], [], []>} : vector<16x16xf32>, vector<16x16xf32>, vector<16x16xf32> -> vector<16x16xf32>
    %cst_49 = arith.constant dense<0.000000e+00> : vector<16x16xf32>
    %56 = tpu.matmul %54, %21, %cst_49 {dimension_numbers = #tpu.dot_dimension_numbers<[1], [0], [0], [1], [0, 0, 1, 1], [], []>} : vector<16x16xf32>, vector<16x16xf32>, vector<16x16xf32> -> vector<16x16xf32>
    %57 = arith.addf %49, %54 : vector<16x16xf32>
    %cst_50 = arith.constant dense<0.000000e+00> : vector<16x16xf32>
    %58 = tpu.matmul %57, %23, %cst_50 {dimension_numbers = #tpu.dot_dimension_numbers<[1], [0], [0], [1], [0, 0, 1, 1], [], []>} : vector<16x16xf32>, vector<16x16xf32>, vector<16x16xf32> -> vector<16x16xf32>
    %59 = arith.subf %55, %56 : vector<16x16xf32>
    %60 = arith.subf %58, %55 : vector<16x16xf32>
    %61 = arith.subf %60, %56 : vector<16x16xf32>
    %cst_51 = arith.constant dense<0.000000e+00> : vector<16x16xf32>
    %62 = tpu.matmul %13, %59, %cst_51 {dimension_numbers = #tpu.dot_dimension_numbers<[1], [0], [0], [1], [0, 0, 1, 1], [], []>} : vector<16x16xf32>, vector<16x16xf32>, vector<16x16xf32> -> vector<16x16xf32>
    %cst_52 = arith.constant dense<0.000000e+00> : vector<16x16xf32>
    %63 = tpu.matmul %15, %61, %cst_52 {dimension_numbers = #tpu.dot_dimension_numbers<[1], [0], [0], [1], [0, 0, 1, 1], [], []>} : vector<16x16xf32>, vector<16x16xf32>, vector<16x16xf32> -> vector<16x16xf32>
    %64 = arith.addf %59, %61 : vector<16x16xf32>
    %cst_53 = arith.constant dense<0.000000e+00> : vector<16x16xf32>
    %65 = tpu.matmul %17, %64, %cst_53 {dimension_numbers = #tpu.dot_dimension_numbers<[1], [0], [0], [1], [0, 0, 1, 1], [], []>} : vector<16x16xf32>, vector<16x16xf32>, vector<16x16xf32> -> vector<16x16xf32>
    %66 = arith.subf %62, %63 : vector<16x16xf32>
    %67 = arith.subf %65, %62 : vector<16x16xf32>
    %68 = arith.subf %67, %63 : vector<16x16xf32>
    %69 = arith.index_cast %c0_i32 : i32 to index
    %c0_54 = arith.constant 0 : index
    %c0_55 = arith.constant 0 : index
    %70 = vector.load %arg10[%69, %c0_54, %c0_55] : memref<2x16x16xf32, #tpu.memory_space<vmem>>, vector<1x16x16xf32>
    %71 = vector.shape_cast %70 : vector<1x16x16xf32> to vector<16x16xf32>
    %72 = vector.shape_cast %66 : vector<16x16xf32> to vector<1x16x16xf32>
    tpu.vector_store %arg10[%69, %c0_54, %c0_55], %72 {strides = array<i32>} : memref<2x16x16xf32, #tpu.memory_space<vmem>>, vector<1x16x16xf32>,
    %73 = arith.index_cast %c0_i32 : i32 to index
    %c0_56 = arith.constant 0 : index
    %c0_57 = arith.constant 0 : index
    %74 = vector.load %arg11[%73, %c0_56, %c0_57] : memref<2x16x16xf32, #tpu.memory_space<vmem>>, vector<1x16x16xf32>
    %75 = vector.shape_cast %74 : vector<1x16x16xf32> to vector<16x16xf32>
    %76 = vector.shape_cast %68 : vector<16x16xf32> to vector<1x16x16xf32>
    tpu.vector_store %arg11[%73, %c0_56, %c0_57], %76 {strides = array<i32>} : memref<2x16x16xf32, #tpu.memory_space<vmem>>, vector<1x16x16xf32>,
    %c1_i32 = arith.constant 1 : i32
    %77 = arith.index_cast %c1_i32 : i32 to index
    %c0_58 = arith.constant 0 : index
    %c0_59 = arith.constant 0 : index
    %78 = vector.load %arg1[%77, %c0_58, %c0_59] : memref<2x16x16xf32, #tpu.memory_space<vmem>>, vector<1x16x16xf32>
    %79 = vector.shape_cast %78 : vector<1x16x16xf32> to vector<16x16xf32>
    %80 = arith.index_cast %c1_i32 : i32 to index
    %c0_60 = arith.constant 0 : index
    %c0_61 = arith.constant 0 : index
    %81 = vector.load %arg2[%80, %c0_60, %c0_61] : memref<2x16x16xf32, #tpu.memory_space<vmem>>, vector<1x16x16xf32>
    %82 = vector.shape_cast %81 : vector<1x16x16xf32> to vector<16x16xf32>
    %cst_62 = arith.constant dense<0.000000e+00> : vector<16x16xf32>
    %83 = tpu.matmul %79, %7, %cst_62 {dimension_numbers = #tpu.dot_dimension_numbers<[1], [0], [0], [1], [0, 0, 1, 1], [], []>} : vector<16x16xf32>, vector<16x16xf32>, vector<16x16xf32> -> vector<16x16xf32>
    %cst_63 = arith.constant dense<0.000000e+00> : vector<16x16xf32>
    %84 = tpu.matmul %82, %9, %cst_63 {dimension_numbers = #tpu.dot_dimension_numbers<[1], [0], [0], [1], [0, 0, 1, 1], [], []>} : vector<16x16xf32>, vector<16x16xf32>, vector<16x16xf32> -> vector<16x16xf32>
    %85 = arith.addf %79, %82 : vector<16x16xf32>
    %cst_64 = arith.constant dense<0.000000e+00> : vector<16x16xf32>
    %86 = tpu.matmul %85, %11, %cst_64 {dimension_numbers = #tpu.dot_dimension_numbers<[1], [0], [0], [1], [0, 0, 1, 1], [], []>} : vector<16x16xf32>, vector<16x16xf32>, vector<16x16xf32> -> vector<16x16xf32>
    %87 = arith.subf %83, %84 : vector<16x16xf32>
    %88 = arith.subf %86, %83 : vector<16x16xf32>
    %89 = arith.subf %88, %84 : vector<16x16xf32>
    %cst_65 = arith.constant dense<0.000000e+00> : vector<16x16xf32>
    %90 = tpu.matmul %1, %87, %cst_65 {dimension_numbers = #tpu.dot_dimension_numbers<[1], [0], [0], [1], [0, 0, 1, 1], [], []>} : vector<16x16xf32>, vector<16x16xf32>, vector<16x16xf32> -> vector<16x16xf32>
    %cst_66 = arith.constant dense<0.000000e+00> : vector<16x16xf32>
    %91 = tpu.matmul %3, %89, %cst_66 {dimension_numbers = #tpu.dot_dimension_numbers<[1], [0], [0], [1], [0, 0, 1, 1], [], []>} : vector<16x16xf32>, vector<16x16xf32>, vector<16x16xf32> -> vector<16x16xf32>
    %92 = arith.addf %87, %89 : vector<16x16xf32>
    %cst_67 = arith.constant dense<0.000000e+00> : vector<16x16xf32>
    %93 = tpu.matmul %5, %92, %cst_67 {dimension_numbers = #tpu.dot_dimension_numbers<[1], [0], [0], [1], [0, 0, 1, 1], [], []>} : vector<16x16xf32>, vector<16x16xf32>, vector<16x16xf32> -> vector<16x16xf32>
    %94 = arith.subf %90, %91 : vector<16x16xf32>
    %95 = arith.subf %93, %90 : vector<16x16xf32>
    %96 = arith.subf %95, %91 : vector<16x16xf32>
    %97 = arith.index_cast %c1_i32 : i32 to index
    %c0_68 = arith.constant 0 : index
    %c0_69 = arith.constant 0 : index
    %98 = vector.load %arg3[%97, %c0_68, %c0_69] : memref<2x16x16xf32, #tpu.memory_space<vmem>>, vector<1x16x16xf32>
    %99 = vector.shape_cast %98 : vector<1x16x16xf32> to vector<16x16xf32>
    %100 = arith.addf %99, %94 : vector<16x16xf32>
    %101 = arith.mulf %100, %24 : vector<16x16xf32>
    %102 = arith.index_cast %c1_i32 : i32 to index
    %c0_70 = arith.constant 0 : index
    %c0_71 = arith.constant 0 : index
    %103 = vector.load %arg4[%102, %c0_70, %c0_71] : memref<2x16x16xf32, #tpu.memory_space<vmem>>, vector<1x16x16xf32>
    %104 = vector.shape_cast %103 : vector<1x16x16xf32> to vector<16x16xf32>
    %105 = arith.addf %104, %96 : vector<16x16xf32>
    %106 = arith.mulf %105, %24 : vector<16x16xf32>
    %cst_72 = arith.constant dense<0.000000e+00> : vector<16x16xf32>
    %107 = tpu.matmul %101, %19, %cst_72 {dimension_numbers = #tpu.dot_dimension_numbers<[1], [0], [0], [1], [0, 0, 1, 1], [], []>} : vector<16x16xf32>, vector<16x16xf32>, vector<16x16xf32> -> vector<16x16xf32>
    %cst_73 = arith.constant dense<0.000000e+00> : vector<16x16xf32>
    %108 = tpu.matmul %106, %21, %cst_73 {dimension_numbers = #tpu.dot_dimension_numbers<[1], [0], [0], [1], [0, 0, 1, 1], [], []>} : vector<16x16xf32>, vector<16x16xf32>, vector<16x16xf32> -> vector<16x16xf32>
    %109 = arith.addf %101, %106 : vector<16x16xf32>
    %cst_74 = arith.constant dense<0.000000e+00> : vector<16x16xf32>
    %110 = tpu.matmul %109, %23, %cst_74 {dimension_numbers = #tpu.dot_dimension_numbers<[1], [0], [0], [1], [0, 0, 1, 1], [], []>} : vector<16x16xf32>, vector<16x16xf32>, vector<16x16xf32> -> vector<16x16xf32>
    %111 = arith.subf %107, %108 : vector<16x16xf32>
    %112 = arith.subf %110, %107 : vector<16x16xf32>
    %113 = arith.subf %112, %108 : vector<16x16xf32>
    %cst_75 = arith.constant dense<0.000000e+00> : vector<16x16xf32>
    %114 = tpu.matmul %13, %111, %cst_75 {dimension_numbers = #tpu.dot_dimension_numbers<[1], [0], [0], [1], [0, 0, 1, 1], [], []>} : vector<16x16xf32>, vector<16x16xf32>, vector<16x16xf32> -> vector<16x16xf32>
    %cst_76 = arith.constant dense<0.000000e+00> : vector<16x16xf32>
    %115 = tpu.matmul %15, %113, %cst_76 {dimension_numbers = #tpu.dot_dimension_numbers<[1], [0], [0], [1], [0, 0, 1, 1], [], []>} : vector<16x16xf32>, vector<16x16xf32>, vector<16x16xf32> -> vector<16x16xf32>
    %116 = arith.addf %111, %113 : vector<16x16xf32>
    %cst_77 = arith.constant dense<0.000000e+00> : vector<16x16xf32>
    %117 = tpu.matmul %17, %116, %cst_77 {dimension_numbers = #tpu.dot_dimension_numbers<[1], [0], [0], [1], [0, 0, 1, 1], [], []>} : vector<16x16xf32>, vector<16x16xf32>, vector<16x16xf32> -> vector<16x16xf32>
    %118 = arith.subf %114, %115 : vector<16x16xf32>
    %119 = arith.subf %117, %114 : vector<16x16xf32>
    %120 = arith.subf %119, %115 : vector<16x16xf32>
    %121 = arith.index_cast %c1_i32 : i32 to index
    %c0_78 = arith.constant 0 : index
    %c0_79 = arith.constant 0 : index
    %122 = vector.load %arg10[%121, %c0_78, %c0_79] : memref<2x16x16xf32, #tpu.memory_space<vmem>>, vector<1x16x16xf32>
    %123 = vector.shape_cast %122 : vector<1x16x16xf32> to vector<16x16xf32>
    %124 = vector.shape_cast %118 : vector<16x16xf32> to vector<1x16x16xf32>
    tpu.vector_store %arg10[%121, %c0_78, %c0_79], %124 {strides = array<i32>} : memref<2x16x16xf32, #tpu.memory_space<vmem>>, vector<1x16x16xf32>,
    %125 = arith.index_cast %c1_i32 : i32 to index
    %c0_80 = arith.constant 0 : index
    %c0_81 = arith.constant 0 : index
    %126 = vector.load %arg11[%125, %c0_80, %c0_81] : memref<2x16x16xf32, #tpu.memory_space<vmem>>, vector<1x16x16xf32>
    %127 = vector.shape_cast %126 : vector<1x16x16xf32> to vector<16x16xf32>
    %128 = vector.shape_cast %120 : vector<16x16xf32> to vector<1x16x16xf32>
    tpu.vector_store %arg11[%125, %c0_80, %c0_81], %128 {strides = array<i32>} : memref<2x16x16xf32, #tpu.memory_space<vmem>>, vector<1x16x16xf32>,
    %c2_i32 = arith.constant 2 : i32
    return
  }
  func.func @transform_0(%arg0: i32) -> (i32, i32, i32) {
    %c0_i32 = arith.constant 0 : i32
    %c0_i32_0 = arith.constant 0 : i32
    %c0_i32_1 = arith.constant 0 : i32
    return %arg0, %c0_i32, %c0_i32_0 : i32, i32, i32
  }
  func.func @transform_1(%arg0: i32) -> (i32, i32, i32) {
    %c0_i32 = arith.constant 0 : i32
    %c0_i32_0 = arith.constant 0 : i32
    %c0_i32_1 = arith.constant 0 : i32
    return %arg0, %c0_i32, %c0_i32_0 : i32, i32, i32
  }
  func.func @transform_2(%arg0: i32) -> (i32, i32, i32) {
    %c0_i32 = arith.constant 0 : i32
    %c0_i32_0 = arith.constant 0 : i32
    %c0_i32_1 = arith.constant 0 : i32
    return %arg0, %c0_i32, %c0_i32_0 : i32, i32, i32
  }
  func.func @transform_3(%arg0: i32) -> (i32, i32, i32) {
    %c0_i32 = arith.constant 0 : i32
    %c0_i32_0 = arith.constant 0 : i32
    %c0_i32_1 = arith.constant 0 : i32
    return %arg0, %c0_i32, %c0_i32_0 : i32, i32, i32
  }
  func.func @transform_4(%arg0: i32) -> (i32, i32) {
    %c0_i32 = arith.constant 0 : i32
    %c0_i32_0 = arith.constant 0 : i32
    %c0_i32_1 = arith.constant 0 : i32
    return %c0_i32, %c0_i32_0 : i32, i32
  }
  func.func @transform_5(%arg0: i32) -> (i32, i32, i32) {
    %c0_i32 = arith.constant 0 : i32
    %c0_i32_0 = arith.constant 0 : i32
    %c0_i32_1 = arith.constant 0 : i32
    %c0_i32_2 = arith.constant 0 : i32
    return %c0_i32, %c0_i32_0, %c0_i32_1 : i32, i32, i32
  }
  func.func @transform_6(%arg0: i32) -> (i32, i32, i32) {
    %c0_i32 = arith.constant 0 : i32
    %c0_i32_0 = arith.constant 0 : i32
    %c0_i32_1 = arith.constant 0 : i32
    %c0_i32_2 = arith.constant 0 : i32
    return %c0_i32, %c0_i32_0, %c0_i32_1 : i32, i32, i32
  }
  func.func @transform_7(%arg0: i32) -> (i32, i32, i32) {
    %c0_i32 = arith.constant 0 : i32
    %c0_i32_0 = arith.constant 0 : i32
    %c0_i32_1 = arith.constant 0 : i32
    %c0_i32_2 = arith.constant 0 : i32
    return %c0_i32, %c0_i32_0, %c0_i32_1 : i32, i32, i32
  }
  func.func @transform_8(%arg0: i32) -> (i32, i32, i32) {
    %c0_i32 = arith.constant 0 : i32
    %c0_i32_0 = arith.constant 0 : i32
    %c0_i32_1 = arith.constant 0 : i32
    %c0_i32_2 = arith.constant 0 : i32
    return %c0_i32, %c0_i32_0, %c0_i32_1 : i32, i32, i32
  }
  func.func @transform_9(%arg0: i32) -> (i32, i32, i32) {
    %c0_i32 = arith.constant 0 : i32
    %c0_i32_0 = arith.constant 0 : i32
    %c0_i32_1 = arith.constant 0 : i32
    return %arg0, %c0_i32, %c0_i32_0 : i32, i32, i32
  }
  func.func @transform_10(%arg0: i32) -> (i32, i32, i32) {
    %c0_i32 = arith.constant 0 : i32
    %c0_i32_0 = arith.constant 0 : i32
    %c0_i32_1 = arith.constant 0 : i32
    return %arg0, %c0_i32, %c0_i32_0 : i32, i32, i32
  }
}

</mosaic_0001>

<llo_original>
// kernel: custom-call
$region0: #{custom-call}
  %s0 = inlined_call_operand.hbm [shape: c64[2,4,16,16], index: 0, kind: input, shape index: {}]
  %s1 = inlined_call_operand.vmem [shape: f32[2,4,16,16], index: 1, kind: output, shape index: {}]
  $region1: #{custom-call} parent=0
    #allocation0 [shape = 's32[1]{0}', space=sflag, size = 0x4, scoped, tag = 'scoped memory for custom-call']
    %2 = vsyncpa [#allocation0], 0
    %s3 = sshll.u32 %s1, 4
    %s4 = int_to_ptr.vmem [resolvable:$true] %s3
    %6 = dma.hbm_to_vmem [thread:$0]  %s0, 2048, %s4, [#allocation0]
    %7 = dma.done [#allocation0], 2048
    %8 = vsyncpa [#allocation0], 1

// kernel: custom-call.1
$region0: #{custom-call.1}
  %s0 = inlined_call_operand.hbm [shape: c64[2,4,16,16], index: 0, kind: input, shape index: {}]
  %s1 = inlined_call_operand.vmem [shape: f32[2,4,16,16], index: 1, kind: output, shape index: {}]
  %s2 = scalar_lea.hbm %s0, 2048
  $region1: #{custom-call.1} parent=0
    #allocation0 [shape = 's32[1]{0}', space=sflag, size = 0x4, scoped, tag = 'scoped memory for custom-call.1']
    %3 = vsyncpa [#allocation0], 0
    %s4 = sshll.u32 %s1, 4
    %s5 = int_to_ptr.vmem [resolvable:$true] %s4
    %7 = dma.hbm_to_vmem [thread:$0]  %s2, 2048, %s5, [#allocation0]
    %8 = dma.done [#allocation0], 2048
    %9 = vsyncpa [#allocation0], 1

// kernel: custom-call.6
$region0: #{custom-call.6}
  %s0 = inlined_call_operand.vmem [shape: f32[2,4,16,16], index: 0, kind: input, shape index: {}]
  %s1 = inlined_call_operand.vmem [shape: f32[2,4,16,16], index: 1, kind: input, shape index: {}]
  %s2 = inlined_call_operand.hbm [shape: c64[2,4,16,16], index: 2, kind: output, shape index: {}]
  %s3 = scalar_lea.hbm %s2, 2048
  $region1: #{custom-call.6} parent=0
    #allocation0 [shape = 's32[1]{0}', space=sflag, size = 0x4, scoped, tag = 'scoped memory for custom-call.6']
    %4 = vsyncpa [#allocation0], 0
    %s5 = sshll.u32 %s0, 4
    %s6 = int_to_ptr.vmem [resolvable:$true] %s5
    %8 = dma.vmem_to_hbm [thread:$0]  %s6, 2048, %s2, [#allocation0]
    %9 = dma.done [#allocation0], 2048
    %10 = vsyncpa [#allocation0], 1
  $region2: #{custom-call.6} parent=0
    #allocation1 [shape = 's32[1]{0}', space=sflag, size = 0x4, scoped, tag = 'scoped memory for custom-call.6']
    %11 = vsyncpa [#allocation1], 0
    %s12 = sshll.u32 %s1, 4
    %s13 = int_to_ptr.vmem [resolvable:$true] %s12
    %15 = dma.vmem_to_hbm [thread:$0]  %s13, 2048, %s3, [#allocation1]
    %16 = dma.done [#allocation1], 2048
    %17 = vsyncpa [#allocation1], 1

// kernel: _forward_impl.1
$region0: #{_forward_impl.1}
  #allocation0 [shape = 'u32[]', space=smem, size = 0x4, offset = 0x4, fixed_abs, tag = 'smem constant byte address 0x4 - core index']
  #allocation1 [shape = 'u32[144,128]{1,0:T(1,128)}', space=vmem, size = 0x12000, scoped, tag = 'internal scratch']
  %s0 = inlined_call_operand.vmem [shape: f32[8,16,16], index: 0, kind: input, shape index: {}]
  %s1 = inlined_call_operand.vmem [shape: f32[8,16,16], index: 1, kind: input, shape index: {}]
  %s2 = inlined_call_operand.vmem [shape: f32[8,16,16], index: 2, kind: input, shape index: {}]
  %s3 = inlined_call_operand.vmem [shape: f32[8,16,16], index: 3, kind: input, shape index: {}]
  %s4 = inlined_call_operand.vmem [shape: f32[16,16], index: 4, kind: input, shape index: {}]
  %s5 = inlined_call_operand.vmem [shape: f32[3,16,16], index: 5, kind: input, shape index: {}]
  %s6 = inlined_call_operand.vmem [shape: f32[3,16,16], index: 6, kind: input, shape index: {}]
  %s7 = inlined_call_operand.vmem [shape: f32[3,16,16], index: 7, kind: input, shape index: {}]
  %s8 = inlined_call_operand.vmem [shape: f32[3,16,16], index: 8, kind: input, shape index: {}]
  %s9 = inlined_call_operand.vmem [shape: f32[8,16,16], index: 9, kind: output, shape index: {0}]
  %s10 = inlined_call_operand.vmem [shape: f32[8,16,16], index: 10, kind: output, shape index: {1}]
  %11 = xla_tuple %s9, %s10
  %s12 = sld [smem:[#allocation0]]
  $region77: #{_forward_impl.1} parent=0
    _
  %s14 = ssub.s32 1, %s12
  %s15 = scalar_select 0, %s14, %s12
  loop: start=0, step=1, limit=6
  $region2: #{_forward_impl.1} parent=0 // loop_pre_header
    _
  $region3: #{_forward_impl.1} parent=0 // loop_header
    %s17 = sphi 0, %s21
    %p18 = scmp.ge.s32.totalorder %s17, 6
    %s27 = sphi 0, %s29
    %s30 = sphi 0, %s27
    %s31 = sphi 0, %s30
    %s47 = sphi 0, %s31
    %s53 = sphi 0, %s55
    %s56 = sphi 0, %s53
    %s57 = sphi 0, %s56
    %s73 = sphi 0, %s57
    %s79 = sphi 0, %s81
    %s82 = sphi 0, %s79
    %s83 = sphi 0, %s82
    %s99 = sphi 0, %s83
    %s105 = sphi 0, %s107
    %s108 = sphi 0, %s105
    %s109 = sphi 0, %s108
    %s125 = sphi 0, %s109
    %s129 = sphi 0, %s129
    %s131 = sphi 0, %s129
    %s132 = sphi 0, %s131
    %s146 = sphi 0, %s132
    %s150 = sphi 0, %s150
    %s152 = sphi 0, %s150
    %s153 = sphi 0, %s152
    %s167 = sphi 0, %s153
    %s171 = sphi 0, %s171
    %s173 = sphi 0, %s171
    %s174 = sphi 0, %s173
    %s188 = sphi 0, %s174
    %s192 = sphi 0, %s192
    %s194 = sphi 0, %s192
    %s195 = sphi 0, %s194
    %s209 = sphi 0, %s195
    %s213 = sphi 0, %s213
    %s215 = sphi 0, %s213
    %s216 = sphi 0, %s215
    %s230 = sphi 0, %s216
    %s236 = sphi 0, %s238
    %s239 = sphi 0, %s236
    %s240 = sphi 0, %s239
    %s256 = sphi 0, %s240
    %s262 = sphi 0, %s264
    %s265 = sphi 0, %s262
    %s266 = sphi 0, %s265
    %s282 = sphi 0, %s266
  $region4: #{_forward_impl.1} parent=0 // loop_header_branch
    %20 = sbr.rel (%p18) target = $region8
  $region5: #{_forward_impl.1} parent=0 // loop_body
    %s22 = ssub.s32 %s17, 1
    %s23 = ssub.s32 %s17, 2
    %s24 = sadd.s32 %s17, 1
    %s25 = ssub.s32 %s17, %s24
    %p26 = scmp.eq.s32.totalorder %s25, 0
    %s28 = sadd.s32 %s27, 1
    %s29 = scalar_select %p26, %s27, %s28
    %p32 = pneg %p26
    %p33 = scmp.eq.s32.totalorder %s17, 3
    %p34 = por %p32, %p33
    %p35 = scmp.ne.s32.totalorder %s27, %s30
    %p36 = scmp.eq.s32.totalorder %s17, 0
    %p37 = por %p35, %p36
    %p38 = scmp.ne.s32.totalorder %s27, %s30
    %p39 = scmp.eq.s32.totalorder %s22, 3
    %p40 = por %p38, %p39
    %p41 = scmp.ne.s32.totalorder %s30, %s31
    %p42 = scmp.eq.s32.totalorder %s22, 0
    %p43 = por %p41, %p42
    %p44 = scmp.ne.s32.totalorder %s30, %s31
    %p45 = scmp.eq.s32.totalorder %s23, 3
    %p46 = por %p44, %p45
    %p48 = scmp.ne.s32.totalorder %s31, %s47
    %p49 = scmp.eq.s32.totalorder %s23, 0
    %p50 = por %p48, %p49
    %s51 = ssub.s32 %s17, %s24
    %p52 = scmp.eq.s32.totalorder %s51, 0
    %s54 = sadd.s32 %s53, 1
    %s55 = scalar_select %p52, %s53, %s54
    %p58 = pneg %p52
    %p59 = scmp.eq.s32.totalorder %s17, 3
    %p60 = por %p58, %p59
    %p61 = scmp.ne.s32.totalorder %s53, %s56
    %p62 = scmp.eq.s32.totalorder %s17, 0
    %p63 = por %p61, %p62
    %p64 = scmp.ne.s32.totalorder %s53, %s56
    %p65 = scmp.eq.s32.totalorder %s22, 3
    %p66 = por %p64, %p65
    %p67 = scmp.ne.s32.totalorder %s56, %s57
    %p68 = scmp.eq.s32.totalorder %s22, 0
    %p69 = por %p67, %p68
    %p70 = scmp.ne.s32.totalorder %s56, %s57
    %p71 = scmp.eq.s32.totalorder %s23, 3
    %p72 = por %p70, %p71
    %p74 = scmp.ne.s32.totalorder %s57, %s73
    %p75 = scmp.eq.s32.totalorder %s23, 0
    %p76 = por %p74, %p75
    %s77 = ssub.s32 %s17, %s24
    %p78 = scmp.eq.s32.totalorder %s77, 0
    %s80 = sadd.s32 %s79, 1
    %s81 = scalar_select %p78, %s79, %s80
    %p84 = pneg %p78
    %p85 = scmp.eq.s32.totalorder %s17, 3
    %p86 = por %p84, %p85
    %p87 = scmp.ne.s32.totalorder %s79, %s82
    %p88 = scmp.eq.s32.totalorder %s17, 0
    %p89 = por %p87, %p88
    %p90 = scmp.ne.s32.totalorder %s79, %s82
    %p91 = scmp.eq.s32.totalorder %s22, 3
    %p92 = por %p90, %p91
    %p93 = scmp.ne.s32.totalorder %s82, %s83
    %p94 = scmp.eq.s32.totalorder %s22, 0
    %p95 = por %p93, %p94
    %p96 = scmp.ne.s32.totalorder %s82, %s83
    %p97 = scmp.eq.s32.totalorder %s23, 3
    %p98 = por %p96, %p97
    %p100 = scmp.ne.s32.totalorder %s83, %s99
    %p101 = scmp.eq.s32.totalorder %s23, 0
    %p102 = por %p100, %p101
    %s103 = ssub.s32 %s17, %s24
    %p104 = scmp.eq.s32.totalorder %s103, 0
    %s106 = sadd.s32 %s105, 1
    %s107 = scalar_select %p104, %s105, %s106
    %p110 = pneg %p104
    %p111 = scmp.eq.s32.totalorder %s17, 3
    %p112 = por %p110, %p111
    %p113 = scmp.ne.s32.totalorder %s105, %s108
    %p114 = scmp.eq.s32.totalorder %s17, 0
    %p115 = por %p113, %p114
    %p116 = scmp.ne.s32.totalorder %s105, %s108
    %p117 = scmp.eq.s32.totalorder %s22, 3
    %p118 = por %p116, %p117
    %p119 = scmp.ne.s32.totalorder %s108, %s109
    %p120 = scmp.eq.s32.totalorder %s22, 0
    %p121 = por %p119, %p120
    %p122 = scmp.ne.s32.totalorder %s108, %s109
    %p123 = scmp.eq.s32.totalorder %s23, 3
    %p124 = por %p122, %p123
    %p126 = scmp.ne.s32.totalorder %s109, %s125
    %p127 = scmp.eq.s32.totalorder %s23, 0
    %p128 = por %p126, %p127
    %s130 = sadd.s32 %s129, 1
    %p133 = scmp.eq.s32.totalorder %s17, 3
    %p134 = scmp.ne.s32.totalorder %s129, %s131
    %p135 = scmp.eq.s32.totalorder %s17, 0
    %p136 = por %p134, %p135
    %p137 = scmp.ne.s32.totalorder %s129, %s131
    %p138 = scmp.eq.s32.totalorder %s22, 3
    %p139 = por %p137, %p138
    %p140 = scmp.ne.s32.totalorder %s131, %s132
    %p141 = scmp.eq.s32.totalorder %s22, 0
    %p142 = por %p140, %p141
    %p143 = scmp.ne.s32.totalorder %s131, %s132
    %p144 = scmp.eq.s32.totalorder %s23, 3
    %p145 = por %p143, %p144
    %p147 = scmp.ne.s32.totalorder %s132, %s146
    %p148 = scmp.eq.s32.totalorder %s23, 0
    %p149 = por %p147, %p148
    %s151 = sadd.s32 %s150, 1
    %p154 = scmp.eq.s32.totalorder %s17, 3
    %p155 = scmp.ne.s32.totalorder %s150, %s152
    %p156 = scmp.eq.s32.totalorder %s17, 0
    %p157 = por %p155, %p156
    %p158 = scmp.ne.s32.totalorder %s150, %s152
    %p159 = scmp.eq.s32.totalorder %s22, 3
    %p160 = por %p158, %p159
    %p161 = scmp.ne.s32.totalorder %s152, %s153
    %p162 = scmp.eq.s32.totalorder %s22, 0
    %p163 = por %p161, %p162
    %p164 = scmp.ne.s32.totalorder %s152, %s153
    %p165 = scmp.eq.s32.totalorder %s23, 3
    %p166 = por %p164, %p165
    %p168 = scmp.ne.s32.totalorder %s153, %s167
    %p169 = scmp.eq.s32.totalorder %s23, 0
    %p170 = por %p168, %p169
    %s172 = sadd.s32 %s171, 1
    %p175 = scmp.eq.s32.totalorder %s17, 3
    %p176 = scmp.ne.s32.totalorder %s171, %s173
    %p177 = scmp.eq.s32.totalorder %s17, 0
    %p178 = por %p176, %p177
    %p179 = scmp.ne.s32.totalorder %s171, %s173
    %p180 = scmp.eq.s32.totalorder %s22, 3
    %p181 = por %p179, %p180
    %p182 = scmp.ne.s32.totalorder %s173, %s174
    %p183 = scmp.eq.s32.totalorder %s22, 0
    %p184 = por %p182, %p183
    %p185 = scmp.ne.s32.totalorder %s173, %s174
    %p186 = scmp.eq.s32.totalorder %s23, 3
    %p187 = por %p185, %p186
    %p189 = scmp.ne.s32.totalorder %s174, %s188
    %p190 = scmp.eq.s32.totalorder %s23, 0
    %p191 = por %p189, %p190
    %s193 = sadd.s32 %s192, 1
    %p196 = scmp.eq.s32.totalorder %s17, 3
    %p197 = scmp.ne.s32.totalorder %s192, %s194
    %p198 = scmp.eq.s32.totalorder %s17, 0
    %p199 = por %p197, %p198
    %p200 = scmp.ne.s32.totalorder %s192, %s194
    %p201 = scmp.eq.s32.totalorder %s22, 3
    %p202 = por %p200, %p201
    %p203 = scmp.ne.s32.totalorder %s194, %s195
    %p204 = scmp.eq.s32.totalorder %s22, 0
    %p205 = por %p203, %p204
    %p206 = scmp.ne.s32.totalorder %s194, %s195
    %p207 = scmp.eq.s32.totalorder %s23, 3
    %p208 = por %p206, %p207
    %p210 = scmp.ne.s32.totalorder %s195, %s209
    %p211 = scmp.eq.s32.totalorder %s23, 0
    %p212 = por %p210, %p211
    %s214 = sadd.s32 %s213, 1
    %p217 = scmp.eq.s32.totalorder %s17, 3
    %p218 = scmp.ne.s32.totalorder %s213, %s215
    %p219 = scmp.eq.s32.totalorder %s17, 0
    %p220 = por %p218, %p219
    %p221 = scmp.ne.s32.totalorder %s213, %s215
    %p222 = scmp.eq.s32.totalorder %s22, 3
    %p223 = por %p221, %p222
    %p224 = scmp.ne.s32.totalorder %s215, %s216
    %p225 = scmp.eq.s32.totalorder %s22, 0
    %p226 = por %p224, %p225
    %p227 = scmp.ne.s32.totalorder %s215, %s216
    %p228 = scmp.eq.s32.totalorder %s23, 3
    %p229 = por %p227, %p228
    %p231 = scmp.ne.s32.totalorder %s216, %s230
    %p232 = scmp.eq.s32.totalorder %s23, 0
    %p233 = por %p231, %p232
    %s234 = ssub.s32 %s17, %s24
    %p235 = scmp.eq.s32.totalorder %s234, 0
    %s237 = sadd.s32 %s236, 1
    %s238 = scalar_select %p235, %s236, %s237
    %p241 = pneg %p235
    %p242 = scmp.eq.s32.totalorder %s17, 3
    %p243 = por %p241, %p242
    %p244 = scmp.ne.s32.totalorder %s236, %s239
    %p245 = scmp.eq.s32.totalorder %s17, 0
    %p246 = por %p244, %p245
    %p247 = scmp.ne.s32.totalorder %s236, %s239
    %p248 = scmp.eq.s32.totalorder %s22, 3
    %p249 = por %p247, %p248
    %p250 = scmp.ne.s32.totalorder %s239, %s240
    %p251 = scmp.eq.s32.totalorder %s22, 0
    %p252 = por %p250, %p251
    %p253 = scmp.ne.s32.totalorder %s239, %s240
    %p254 = scmp.eq.s32.totalorder %s23, 3
    %p255 = por %p253, %p254
    %p257 = scmp.ne.s32.totalorder %s240, %s256
    %p258 = scmp.eq.s32.totalorder %s23, 0
    %p259 = por %p257, %p258
    %s260 = ssub.s32 %s17, %s24
    %p261 = scmp.eq.s32.totalorder %s260, 0
    %s263 = sadd.s32 %s262, 1
    %s264 = scalar_select %p261, %s262, %s263
    %p267 = pneg %p261
    %p268 = scmp.eq.s32.totalorder %s17, 3
    %p269 = por %p267, %p268
    %p270 = scmp.ne.s32.totalorder %s262, %s265
    %p271 = scmp.eq.s32.totalorder %s17, 0
    %p272 = por %p270, %p271
    %p273 = scmp.ne.s32.totalorder %s262, %s265
    %p274 = scmp.eq.s32.totalorder %s22, 3
    %p275 = por %p273, %p274
    %p276 = scmp.ne.s32.totalorder %s265, %s266
    %p277 = scmp.eq.s32.totalorder %s22, 0
    %p278 = por %p276, %p277
    %p279 = scmp.ne.s32.totalorder %s265, %s266
    %p280 = scmp.eq.s32.totalorder %s23, 3
    %p281 = por %p279, %p280
    %p283 = scmp.ne.s32.totalorder %s266, %s282
    %p284 = scmp.eq.s32.totalorder %s23, 0
    %p285 = por %p283, %p284
    %p286 = scmp.le.s32.totalorder 1, %s17
    %p287 = scmp.lt.s32.totalorder %s17, 5
    %p288 = pnand %p286, %p287
    %p289 = pneg %p288
    // Predicated region
    $region9: #{_forward_impl.1} parent=5 // pred_check
      _
    $region10: #{_forward_impl.1} parent=5 // pred_check_branch
      %291 = sbr.rel (%p288) target = $region12
    $region11: #{_forward_impl.1} parent=5 // pred_region
      %s292 = ssub.s32 %s17, 1
      // Predicated region
      $region13: #{_forward_impl.1} parent=11 // pred_check
        %p293 = pneg %p142
      $region14: #{_forward_impl.1} parent=11 // pred_check_branch
        %295 = sbr.rel (%p293) target = $region16
      $region15: #{_forward_impl.1} parent=11 // pred_region
        _
      $region16: #{_forward_impl.1} parent=11 // pred_fallthru
        _
      // Predicated region
      $region17: #{_forward_impl.1} parent=11 // pred_check
        %p296 = pneg %p163
      $region18: #{_forward_impl.1} parent=11 // pred_check_branch
        %298 = sbr.rel (%p296) target = $region20
      $region19: #{_forward_impl.1} parent=11 // pred_region
        _
      $region20: #{_forward_impl.1} parent=11 // pred_fallthru
        _
      // Predicated region
      $region21: #{_forward_impl.1} parent=11 // pred_check
        %p299 = pneg %p184
      $region22: #{_forward_impl.1} parent=11 // pred_check_branch
        %301 = sbr.rel (%p299) target = $region24
      $region23: #{_forward_impl.1} parent=11 // pred_region
        _
      $region24: #{_forward_impl.1} parent=11 // pred_fallthru
        _
      // Predicated region
      $region25: #{_forward_impl.1} parent=11 // pred_check
        %p302 = pneg %p205
      $region26: #{_forward_impl.1} parent=11 // pred_check_branch
        %304 = sbr.rel (%p302) target = $region28
      $region27: #{_forward_impl.1} parent=11 // pred_region
        _
      $region28: #{_forward_impl.1} parent=11 // pred_fallthru
        _
      // Predicated region
      $region29: #{_forward_impl.1} parent=11 // pred_check
        %p305 = pneg %p226
      $region30: #{_forward_impl.1} parent=11 // pred_check_branch
        %307 = sbr.rel (%p305) target = $region32
      $region31: #{_forward_impl.1} parent=11 // pred_region
        _
      $region32: #{_forward_impl.1} parent=11 // pred_fallthru
        _
    $region12: #{_forward_impl.1} parent=5 // pred_fallthru
      _
    %p308 = scmp.lt.s32.totalorder %s17, 4
    // Predicated region
    $region33: #{_forward_impl.1} parent=5 // pred_check
      %p309 = pneg %p308
    $region34: #{_forward_impl.1} parent=5 // pred_check_branch
      %311 = sbr.rel (%p309) target = $region36
    $region35: #{_forward_impl.1} parent=5 // pred_region
      // Predicated region
      $region37: #{_forward_impl.1} parent=35 // pred_check
        %p312 = pneg %p37
      $region38: #{_forward_impl.1} parent=35 // pred_check_branch
        %314 = sbr.rel (%p312) target = $region40
      $region39: #{_forward_impl.1} parent=35 // pred_region
        %s315 = smul.u32 2, %s17
        %p316 = scmp.lt.s32.totalorder %s315, 7
        %s317 = scalar_select %p316, %s315, 7
        %s318 = smul.addr %s317, 2
        %s319 = smul.addr %s318, 8
        %s320 = scalar_lea.vmem %s0, %s319
        %s321 = smul.u32 2, %s17
      $region40: #{_forward_impl.1} parent=35 // pred_fallthru
        _
      // Predicated region
      $region41: #{_forward_impl.1} parent=35 // pred_check
        %p322 = pneg %p63
      $region42: #{_forward_impl.1} parent=35 // pred_check_branch
        %324 = sbr.rel (%p322) target = $region44
      $region43: #{_forward_impl.1} parent=35 // pred_region
        %s325 = smul.u32 2, %s17
        %p326 = scmp.lt.s32.totalorder %s325, 7
        %s327 = scalar_select %p326, %s325, 7
        %s328 = smul.addr %s327, 2
        %s329 = smul.addr %s328, 8
        %s330 = scalar_lea.vmem %s1, %s329
        %s331 = smul.u32 2, %s17
      $region44: #{_forward_impl.1} parent=35 // pred_fallthru
        _
      // Predicated region
      $region45: #{_forward_impl.1} parent=35 // pred_check
        %p332 = pneg %p89
      $region46: #{_forward_impl.1} parent=35 // pred_check_branch
        %334 = sbr.rel (%p332) target = $region48
      $region47: #{_forward_impl.1} parent=35 // pred_region
        %s335 = smul.u32 2, %s17
        %p336 = scmp.lt.s32.totalorder %s335, 7
        %s337 = scalar_select %p336, %s335, 7
        %s338 = smul.addr %s337, 2
        %s339 = smul.addr %s338, 8
        %s340 = scalar_lea.vmem %s2, %s339
        %s341 = smul.u32 2, %s17
      $region48: #{_forward_impl.1} parent=35 // pred_fallthru
        _
      // Predicated region
      $region49: #{_forward_impl.1} parent=35 // pred_check
        %p342 = pneg %p115
      $region50: #{_forward_impl.1} parent=35 // pred_check_branch
        %344 = sbr.rel (%p342) target = $region52
      $region51: #{_forward_impl.1} parent=35 // pred_region
        %s345 = smul.u32 2, %s17
        %p346 = scmp.lt.s32.totalorder %s345, 7
        %s347 = scalar_select %p346, %s345, 7
        %s348 = smul.addr %s347, 2
        %s349 = smul.addr %s348, 8
        %s350 = scalar_lea.vmem %s3, %s349
        %s351 = smul.u32 2, %s17
      $region52: #{_forward_impl.1} parent=35 // pred_fallthru
        _
    $region36: #{_forward_impl.1} parent=5 // pred_fallthru
      _
    %p352 = scmp.le.s32.totalorder 1, %s17
    %p353 = scmp.lt.s32.totalorder %s17, 5
    %p354 = pnand %p352, %p353
    %p355 = pneg %p354
    // Predicated region
    $region53: #{_forward_impl.1} parent=5 // pred_check
      _
    $region54: #{_forward_impl.1} parent=5 // pred_check_branch
      %357 = sbr.rel (%p354) target = $region56
    $region55: #{_forward_impl.1} parent=5 // pred_region
      %s358 = ssub.s32 %s17, 1
      %s359 = smul.u32 2, %s22
      %p360 = scmp.lt.s32.totalorder %s359, 7
      %s361 = scalar_select %p360, %s359, 7
      %s362 = smul.addr %s361, 2
      %s363 = smul.addr %s362, 8
      %s364 = scalar_lea.vmem %s0, %s363
      %p365 = pneg %p43
      %p366 = pneg %p40
      %s367 = smul.u32 2, %s22
      %p368 = scmp.lt.s32.totalorder %s367, 7
      %s369 = scalar_select %p368, %s367, 7
      %s370 = smul.addr %s369, 2
      %s371 = smul.addr %s370, 8
      %s372 = scalar_lea.vmem %s1, %s371
      %p373 = pneg %p69
      %p374 = pneg %p66
      %s375 = smul.u32 2, %s22
      %p376 = scmp.lt.s32.totalorder %s375, 7
      %s377 = scalar_select %p376, %s375, 7
      %s378 = smul.addr %s377, 2
      %s379 = smul.addr %s378, 8
      %s380 = scalar_lea.vmem %s2, %s379
      %p381 = pneg %p95
      %p382 = pneg %p92
      %s383 = smul.u32 2, %s22
      %p384 = scmp.lt.s32.totalorder %s383, 7
      %s385 = scalar_select %p384, %s383, 7
      %s386 = smul.addr %s385, 2
      %s387 = smul.addr %s386, 8
      %s388 = scalar_lea.vmem %s3, %s387
      %p389 = pneg %p121
      %p390 = pneg %p118
      %p391 = pneg %p142
      %p392 = pneg %p139
      %p393 = pneg %p163
      %p394 = pneg %p160
      %p395 = pneg %p184
      %p396 = pneg %p181
      %p397 = pneg %p205
      %p398 = pneg %p202
      %p399 = pneg %p226
      %p400 = pneg %p223
      %p401 = pneg %p252
      %p402 = pneg %p249
      %s403 = smul.u32 2, %s22
      %p404 = scmp.lt.s32.totalorder %s403, 7
      %s405 = scalar_select %p404, %s403, 7
      %s406 = smul.addr %s405, 2
      %s407 = smul.addr %s406, 8
      %s408 = scalar_lea.vmem %s9, %s407
      %p409 = pneg %p278
      %p410 = pneg %p275
      %s411 = smul.u32 2, %s22
      %p412 = scmp.lt.s32.totalorder %s411, 7
      %s413 = scalar_select %p412, %s411, 7
      %s414 = smul.addr %s413, 2
      %s415 = smul.addr %s414, 8
      %s416 = scalar_lea.vmem %s10, %s415
      %s417 = smul.u32 2, %s22
      %p418 = scmp.lt.s32.totalorder %s417, 7
      %s419 = scalar_select %p418, %s417, 7
      %s420 = smul.addr %s419, 2
      %s421 = smul.addr %s420, 8
      %s422 = scalar_lea.vmem %s0, %s421
      %s423 = smul.u32 2, %s22
      %s424 = smul.u32 2, %s22
      %p425 = scmp.lt.s32.totalorder %s424, 7
      %s426 = scalar_select %p425, %s424, 7
      %s427 = smul.addr %s426, 2
      %s428 = smul.addr %s427, 8
      %s429 = scalar_lea.vmem %s1, %s428
      %s430 = smul.u32 2, %s22
      %s431 = smul.u32 2, %s22
      %p432 = scmp.lt.s32.totalorder %s431, 7
      %s433 = scalar_select %p432, %s431, 7
      %s434 = smul.addr %s433, 2
      %s435 = smul.addr %s434, 8
      %s436 = scalar_lea.vmem %s2, %s435
      %s437 = smul.u32 2, %s22
      %s438 = smul.u32 2, %s22
      %p439 = scmp.lt.s32.totalorder %s438, 7
      %s440 = scalar_select %p439, %s438, 7
      %s441 = smul.addr %s440, 2
      %s442 = smul.addr %s441, 8
      %s443 = scalar_lea.vmem %s3, %s442
      %s444 = smul.u32 2, %s22
      %s445 = smul.u32 2, %s22
      %p446 = scmp.lt.s32.totalorder %s445, 7
      %s447 = scalar_select %p446, %s445, 7
      %s448 = smul.addr %s447, 2
      %s449 = smul.addr %s448, 8
      %s450 = scalar_lea.vmem %s9, %s449
      %s451 = smul.u32 2, %s22
      %s452 = smul.u32 2, %s22
      %p453 = scmp.lt.s32.totalorder %s452, 7
      %s454 = scalar_select %p453, %s452, 7
      %s455 = smul.addr %s454, 2
      %s456 = smul.addr %s455, 8
      %s457 = scalar_lea.vmem %s10, %s456
      %s458 = smul.u32 2, %s22
      %v459 = vld [vmem:[%s5] sm:$0xff]
      %v460 = vld [vmem:[%s5 + $0x8] sm:$0xff]
      %s461 = scalar_lea.vmem %s5, 16
      %v462 = vld [vmem:[%s461] sm:$0xff]
      %v463 = vld [vmem:[%s461 + $0x8] sm:$0xff]
      %s464 = scalar_lea.vmem %s5, 32
      %v465 = vld [vmem:[%s464] sm:$0xff]
      %v466 = vld [vmem:[%s464 + $0x8] sm:$0xff]
      %v467 = vld [vmem:[%s6] sm:$0xff]
      %v468 = vld [vmem:[%s6 + $0x8] sm:$0xff]
      %s469 = scalar_lea.vmem %s6, 16
      %v470 = vld [vmem:[%s469] sm:$0xff]
      %v471 = vld [vmem:[%s469 + $0x8] sm:$0xff]
      %s472 = scalar_lea.vmem %s6, 32
      %v473 = vld [vmem:[%s472] sm:$0xff]
      %v474 = vld [vmem:[%s472 + $0x8] sm:$0xff]
      %v475 = vld [vmem:[%s7] sm:$0xff]
      %v476 = vld [vmem:[%s7 + $0x8] sm:$0xff]
      %s477 = scalar_lea.vmem %s7, 16
      %v478 = vld [vmem:[%s477] sm:$0xff]
      %v479 = vld [vmem:[%s477 + $0x8] sm:$0xff]
      %s480 = scalar_lea.vmem %s7, 32
      %v481 = vld [vmem:[%s480] sm:$0xff]
      %v482 = vld [vmem:[%s480 + $0x8] sm:$0xff]
      %v483 = vld [vmem:[%s8] sm:$0xff]
      %v484 = vld [vmem:[%s8 + $0x8] sm:$0xff]
      %s485 = scalar_lea.vmem %s8, 16
      %v486 = vld [vmem:[%s485] sm:$0xff]
      %v487 = vld [vmem:[%s485 + $0x8] sm:$0xff]
      %s488 = scalar_lea.vmem %s8, 32
      %v489 = vld [vmem:[%s488] sm:$0xff]
      %v490 = vld [vmem:[%s488 + $0x8] sm:$0xff]
      %v491 = vld [vmem:[%s4] sm:$0xff]
      %v492 = vld [vmem:[%s4 + $0x8] sm:$0xff]
      %v493 = vld [vmem:[%s422] sm:$0xff]
      %v494 = vld [vmem:[%s422 + $0x8] sm:$0xff]
      %v495 = vld [vmem:[%s429] sm:$0xff]
      %v496 = vld [vmem:[%s429 + $0x8] sm:$0xff]
      %vm497 = vcmask 130048
      %v499 = vsel %vm497, %v493, 0
      %v502 = vsel %vm497, %v494, 0
      %504 = vmatprep.subr.mxu0 0.0
      %505 = vmatpush1.msra.mxu0 %v467
      %506 = vmatprep.subr.mxu0 0.0
      %507 = vmatpush1.msra.mxu0 %v468
      %508 = vmatprep.subr.mxu0 0.0
      %509 = vmatpush1.msra.mxu0 0.0
      %510 = vmatprep.subr.mxu0 0.0
      %511 = vmatpush1.msra.mxu0 0.0
      %512 = vmatprep.subr.mxu0 0.0
      %513 = vmatpush1.msra.mxu0 0.0
      %514 = vmatprep.subr.mxu0 0.0
      %515 = vmatpush1.msra.mxu0 0.0
      %516 = vmatprep.subr.mxu0 0.0
      %517 = vmatpush1.msra.mxu0 0.0
      %518 = vmatprep.subr.mxu0 0.0
      %519 = vmatpush1.msra.mxu0 0.0
      %520 = vmatprep.subr.mxu0 0.0
      %521 = vmatpush1.msra.mxu0 0.0
      %522 = vmatprep.subr.mxu0 0.0
      %523 = vmatpush1.msra.mxu0 0.0
      %524 = vmatprep.subr.mxu0 0.0
      %525 = vmatpush1.msra.mxu0 0.0
      %526 = vmatprep.subr.mxu0 0.0
      %527 = vmatpush1.msra.mxu0 0.0
      %528 = vmatprep.subr.mxu0 0.0
      %529 = vmatpush1.msra.mxu0 0.0
      %530 = vmatprep.subr.mxu0 0.0
      %531 = vmatpush1.msra.mxu0 0.0
      %532 = vmatprep.subr.mxu0 0.0
      %533 = vmatpush1.msra.mxu0 0.0
      %534 = vmatprep.subr.mxu0 0.0
      %535 = vmatpush1.msra.mxu0 0.0
      %536 = vmatprep.subr.mxu0 0.0
      %537 = vmatpush1.msra.mxu0 0.0
      %538 = vmatprep.subr.mxu0 0.0
      %539 = vmatpush1.msra.mxu0 0.0
      %540 = vmatprep.subr.mxu0 0.0
      %541 = vmatpush1.msra.mxu0 0.0
      %542 = vmatprep.subr.mxu0 0.0
      %543 = vmatpush1.msra.mxu0 0.0
      %544 = vmatprep.subr.mxu0 0.0
      %545 = vmatpush1.msra.mxu0 0.0
      %546 = vmatprep.subr.mxu0 0.0
      %547 = vmatpush1.msra.mxu0 0.0
      %548 = vmatprep.subr.mxu0 0.0
      %549 = vmatpush1.msra.mxu0 0.0
      %550 = vmatprep.subr.mxu0 0.0
      %551 = vmatpush1.msra.mxu0 0.0
      %552 = vmatprep.subr.mxu0 0.0
      %553 = vmatpush1.msra.mxu0 0.0
      %554 = vmatprep.subr.mxu0 0.0
      %555 = vmatpush1.msra.mxu0 0.0
      %556 = vmatprep.subr.mxu0 0.0
      %557 = vmatpush1.msra.mxu0 0.0
      %558 = vmatprep.subr.mxu0 0.0
      %559 = vmatpush1.msra.mxu0 0.0
      %560 = vmatprep.subr.mxu0 0.0
      %561 = vmatpush1.msra.mxu0 0.0
      %562 = vmatprep.subr.mxu0 0.0
      %563 = vmatpush1.msra.mxu0 0.0
      %564 = vmatprep.subr.mxu0 0.0
      %565 = vmatpush1.msra.mxu0 0.0
      %566 = vmatprep.subr.mxu0 0.0
      %567 = vmatpush1.msra.mxu0 0.0
      %568 = vmatprep.mubr.f32.mxu0 0.0
      %569 = vmatmul.mubr.f32.gmra.mrb[0].mxu0 %v499
      %v570 = vpop.f32.mrb[0].mxu0
      %v571 = vadd.f32 0.0, %v570
      %v572 = vpop.f32.mrb[0].mxu0
      %573 = vmatprep.mubr.f32.mxu0 0.0
      %574 = vmatmul.mubr.f32.gmra.mrb[0].mxu0 %v502
      %v575 = vpop.f32.mrb[0].mxu0
      %v576 = vadd.f32 0.0, %v575
      %v577 = vpop.f32.mrb[0].mxu0
      %578 = vdwg.mxu0
      %v580 = vsel %vm497, %v495, 0
      %v583 = vsel %vm497, %v496, 0
      %585 = vmatprep.subr.mxu0 0.0
      %586 = vmatpush1.msra.mxu0 %v470
      %587 = vmatprep.subr.mxu0 0.0
      %588 = vmatpush1.msra.mxu0 %v471
      %589 = vmatprep.subr.mxu0 0.0
      %590 = vmatpush1.msra.mxu0 0.0
      %591 = vmatprep.subr.mxu0 0.0
      %592 = vmatpush1.msra.mxu0 0.0
      %593 = vmatprep.subr.mxu0 0.0
      %594 = vmatpush1.msra.mxu0 0.0
      %595 = vmatprep.subr.mxu0 0.0
      %596 = vmatpush1.msra.mxu0 0.0
      %597 = vmatprep.subr.mxu0 0.0
      %598 = vmatpush1.msra.mxu0 0.0
      %599 = vmatprep.subr.mxu0 0.0
      %600 = vmatpush1.msra.mxu0 0.0
      %601 = vmatprep.subr.mxu0 0.0
      %602 = vmatpush1.msra.mxu0 0.0
      %603 = vmatprep.subr.mxu0 0.0
      %604 = vmatpush1.msra.mxu0 0.0
      %605 = vmatprep.subr.mxu0 0.0
      %606 = vmatpush1.msra.mxu0 0.0
      %607 = vmatprep.subr.mxu0 0.0
      %608 = vmatpush1.msra.mxu0 0.0
      %609 = vmatprep.subr.mxu0 0.0
      %610 = vmatpush1.msra.mxu0 0.0
      %611 = vmatprep.subr.mxu0 0.0
      %612 = vmatpush1.msra.mxu0 0.0
      %613 = vmatprep.subr.mxu0 0.0
      %614 = vmatpush1.msra.mxu0 0.0
      %615 = vmatprep.subr.mxu0 0.0
      %616 = vmatpush1.msra.mxu0 0.0
      %617 = vmatprep.subr.mxu0 0.0
      %618 = vmatpush1.msra.mxu0 0.0
      %619 = vmatprep.subr.mxu0 0.0
      %620 = vmatpush1.msra.mxu0 0.0
      %621 = vmatprep.subr.mxu0 0.0
      %622 = vmatpush1.msra.mxu0 0.0
      %623 = vmatprep.subr.mxu0 0.0
      %624 = vmatpush1.msra.mxu0 0.0
      %625 = vmatprep.subr.mxu0 0.0
      %626 = vmatpush1.msra.mxu0 0.0
      %627 = vmatprep.subr.mxu0 0.0
      %628 = vmatpush1.msra.mxu0 0.0
      %629 = vmatprep.subr.mxu0 0.0
      %630 = vmatpush1.msra.mxu0 0.0
      %631 = vmatprep.subr.mxu0 0.0
      %632 = vmatpush1.msra.mxu0 0.0
      %633 = vmatprep.subr.mxu0 0.0
      %634 = vmatpush1.msra.mxu0 0.0
      %635 = vmatprep.subr.mxu0 0.0
      %636 = vmatpush1.msra.mxu0 0.0
      %637 = vmatprep.subr.mxu0 0.0
      %638 = vmatpush1.msra.mxu0 0.0
      %639 = vmatprep.subr.mxu0 0.0
      %640 = vmatpush1.msra.mxu0 0.0
      %641 = vmatprep.subr.mxu0 0.0
      %642 = vmatpush1.msra.mxu0 0.0
      %643 = vmatprep.subr.mxu0 0.0
      %644 = vmatpush1.msra.mxu0 0.0
      %645 = vmatprep.subr.mxu0 0.0
      %646 = vmatpush1.msra.mxu0 0.0
      %647 = vmatprep.subr.mxu0 0.0
      %648 = vmatpush1.msra.mxu0 0.0
      %649 = vmatprep.mubr.f32.mxu0 0.0
      %650 = vmatmul.mubr.f32.gmra.mrb[0].mxu0 %v580
      %v651 = vpop.f32.mrb[0].mxu0
      %v652 = vadd.f32 0.0, %v651
      %v653 = vpop.f32.mrb[0].mxu0
      %654 = vmatprep.mubr.f32.mxu0 0.0
      %655 = vmatmul.mubr.f32.gmra.mrb[0].mxu0 %v583
      %v656 = vpop.f32.mrb[0].mxu0
      %v657 = vadd.f32 0.0, %v656
      %v658 = vpop.f32.mrb[0].mxu0
      %659 = vdwg.mxu0
      %v660 = vadd.f32 %v493, %v495
      %v661 = vadd.f32 %v494, %v496
      %v663 = vsel %vm497, %v660, 0
      %v666 = vsel %vm497, %v661, 0
      %668 = vmatprep.subr.mxu0 0.0
      %669 = vmatpush1.msra.mxu0 %v473
      %670 = vmatprep.subr.mxu0 0.0
      %671 = vmatpush1.msra.mxu0 %v474
      %672 = vmatprep.subr.mxu0 0.0
      %673 = vmatpush1.msra.mxu0 0.0
      %674 = vmatprep.subr.mxu0 0.0
      %675 = vmatpush1.msra.mxu0 0.0
      %676 = vmatprep.subr.mxu0 0.0
      %677 = vmatpush1.msra.mxu0 0.0
      %678 = vmatprep.subr.mxu0 0.0
      %679 = vmatpush1.msra.mxu0 0.0
      %680 = vmatprep.subr.mxu0 0.0
      %681 = vmatpush1.msra.mxu0 0.0
      %682 = vmatprep.subr.mxu0 0.0
      %683 = vmatpush1.msra.mxu0 0.0
      %684 = vmatprep.subr.mxu0 0.0
      %685 = vmatpush1.msra.mxu0 0.0
      %686 = vmatprep.subr.mxu0 0.0
      %687 = vmatpush1.msra.mxu0 0.0
      %688 = vmatprep.subr.mxu0 0.0
      %689 = vmatpush1.msra.mxu0 0.0
      %690 = vmatprep.subr.mxu0 0.0
      %691 = vmatpush1.msra.mxu0 0.0
      %692 = vmatprep.subr.mxu0 0.0
      %693 = vmatpush1.msra.mxu0 0.0
      %694 = vmatprep.subr.mxu0 0.0
      %695 = vmatpush1.msra.mxu0 0.0
      %696 = vmatprep.subr.mxu0 0.0
      %697 = vmatpush1.msra.mxu0 0.0
      %698 = vmatprep.subr.mxu0 0.0
      %699 = vmatpush1.msra.mxu0 0.0
      %700 = vmatprep.subr.mxu0 0.0
      %701 = vmatpush1.msra.mxu0 0.0
      %702 = vmatprep.subr.mxu0 0.0
      %703 = vmatpush1.msra.mxu0 0.0
      %704 = vmatprep.subr.mxu0 0.0
      %705 = vmatpush1.msra.mxu0 0.0
      %706 = vmatprep.subr.mxu0 0.0
      %707 = vmatpush1.msra.mxu0 0.0
      %708 = vmatprep.subr.mxu0 0.0
      %709 = vmatpush1.msra.mxu0 0.0
      %710 = vmatprep.subr.mxu0 0.0
      %711 = vmatpush1.msra.mxu0 0.0
      %712 = vmatprep.subr.mxu0 0.0
      %713 = vmatpush1.msra.mxu0 0.0
      %714 = vmatprep.subr.mxu0 0.0
      %715 = vmatpush1.msra.mxu0 0.0
      %716 = vmatprep.subr.mxu0 0.0
      %717 = vmatpush1.msra.mxu0 0.0
      %718 = vmatprep.subr.mxu0 0.0
      %719 = vmatpush1.msra.mxu0 0.0
      %720 = vmatprep.subr.mxu0 0.0
      %721 = vmatpush1.msra.mxu0 0.0
      %722 = vmatprep.subr.mxu0 0.0
      %723 = vmatpush1.msra.mxu0 0.0
      %724 = vmatprep.subr.mxu0 0.0
      %725 = vmatpush1.msra.mxu0 0.0
      %726 = vmatprep.subr.mxu0 0.0
      %727 = vmatpush1.msra.mxu0 0.0
      %728 = vmatprep.subr.mxu0 0.0
      %729 = vmatpush1.msra.mxu0 0.0
      %730 = vmatprep.subr.mxu0 0.0
      %731 = vmatpush1.msra.mxu0 0.0
      %732 = vmatprep.mubr.f32.mxu0 0.0
      %733 = vmatmul.mubr.f32.gmra.mrb[0].mxu0 %v663
      %v734 = vpop.f32.mrb[0].mxu0
      %v735 = vadd.f32 0.0, %v734
      %v736 = vpop.f32.mrb[0].mxu0
      %737 = vmatprep.mubr.f32.mxu0 0.0
      %738 = vmatmul.mubr.f32.gmra.mrb[0].mxu0 %v666
      %v739 = vpop.f32.mrb[0].mxu0
      %v740 = vadd.f32 0.0, %v739
      %v741 = vpop.f32.mrb[0].mxu0
      %742 = vdwg.mxu0
      %v743 = vsub.f32 %v571, %v652
      %v744 = vsub.f32 %v576, %v657
      %v745 = vsub.f32 %v735, %v571
      %v746 = vsub.f32 %v740, %v576
      %v747 = vsub.f32 %v745, %v652
      %v748 = vsub.f32 %v746, %v657
      %v750 = vsel %vm497, %v459, 0
      %v753 = vsel %vm497, %v460, 0
      %755 = vmatprep.subr.mxu0 0.0
      %756 = vmatpush1.msra.mxu0 %v743
      %757 = vmatprep.subr.mxu0 0.0
      %758 = vmatpush1.msra.mxu0 %v744
      %759 = vmatprep.subr.mxu0 0.0
      %760 = vmatpush1.msra.mxu0 0.0
      %761 = vmatprep.subr.mxu0 0.0
      %762 = vmatpush1.msra.mxu0 0.0
      %763 = vmatprep.subr.mxu0 0.0
      %764 = vmatpush1.msra.mxu0 0.0
      %765 = vmatprep.subr.mxu0 0.0
      %766 = vmatpush1.msra.mxu0 0.0
      %767 = vmatprep.subr.mxu0 0.0
      %768 = vmatpush1.msra.mxu0 0.0
      %769 = vmatprep.subr.mxu0 0.0
      %770 = vmatpush1.msra.mxu0 0.0
      %771 = vmatprep.subr.mxu0 0.0
      %772 = vmatpush1.msra.mxu0 0.0
      %773 = vmatprep.subr.mxu0 0.0
      %774 = vmatpush1.msra.mxu0 0.0
      %775 = vmatprep.subr.mxu0 0.0
      %776 = vmatpush1.msra.mxu0 0.0
      %777 = vmatprep.subr.mxu0 0.0
      %778 = vmatpush1.msra.mxu0 0.0
      %779 = vmatprep.subr.mxu0 0.0
      %780 = vmatpush1.msra.mxu0 0.0
      %781 = vmatprep.subr.mxu0 0.0
      %782 = vmatpush1.msra.mxu0 0.0
      %783 = vmatprep.subr.mxu0 0.0
      %784 = vmatpush1.msra.mxu0 0.0
      %785 = vmatprep.subr.mxu0 0.0
      %786 = vmatpush1.msra.mxu0 0.0
      %787 = vmatprep.subr.mxu0 0.0
      %788 = vmatpush1.msra.mxu0 0.0
      %789 = vmatprep.subr.mxu0 0.0
      %790 = vmatpush1.msra.mxu0 0.0
      %791 = vmatprep.subr.mxu0 0.0
      %792 = vmatpush1.msra.mxu0 0.0
      %793 = vmatprep.subr.mxu0 0.0
      %794 = vmatpush1.msra.mxu0 0.0
      %795 = vmatprep.subr.mxu0 0.0
      %796 = vmatpush1.msra.mxu0 0.0
      %797 = vmatprep.subr.mxu0 0.0
      %798 = vmatpush1.msra.mxu0 0.0
      %799 = vmatprep.subr.mxu0 0.0
      %800 = vmatpush1.msra.mxu0 0.0
      %801 = vmatprep.subr.mxu0 0.0
      %802 = vmatpush1.msra.mxu0 0.0
      %803 = vmatprep.subr.mxu0 0.0
      %804 = vmatpush1.msra.mxu0 0.0
      %805 = vmatprep.subr.mxu0 0.0
      %806 = vmatpush1.msra.mxu0 0.0
      %807 = vmatprep.subr.mxu0 0.0
      %808 = vmatpush1.msra.mxu0 0.0
      %809 = vmatprep.subr.mxu0 0.0
      %810 = vmatpush1.msra.mxu0 0.0
      %811 = vmatprep.subr.mxu0 0.0
      %812 = vmatpush1.msra.mxu0 0.0
      %813 = vmatprep.subr.mxu0 0.0
      %814 = vmatpush1.msra.mxu0 0.0
      %815 = vmatprep.subr.mxu0 0.0
      %816 = vmatpush1.msra.mxu0 0.0
      %817 = vmatprep.subr.mxu0 0.0
      %818 = vmatpush1.msra.mxu0 0.0
      %819 = vmatprep.mubr.f32.mxu0 0.0
      %820 = vmatmul.mubr.f32.gmra.mrb[0].mxu0 %v750
      %v821 = vpop.f32.mrb[0].mxu0
      %v822 = vadd.f32 0.0, %v821
      %v823 = vpop.f32.mrb[0].mxu0
      %824 = vmatprep.mubr.f32.mxu0 0.0
      %825 = vmatmul.mubr.f32.gmra.mrb[0].mxu0 %v753
      %v826 = vpop.f32.mrb[0].mxu0
      %v827 = vadd.f32 0.0, %v826
      %v828 = vpop.f32.mrb[0].mxu0
      %829 = vdwg.mxu0
      %v831 = vsel %vm497, %v462, 0
      %v834 = vsel %vm497, %v463, 0
      %836 = vmatprep.subr.mxu0 0.0
      %837 = vmatpush1.msra.mxu0 %v747
      %838 = vmatprep.subr.mxu0 0.0
      %839 = vmatpush1.msra.mxu0 %v748
      %840 = vmatprep.subr.mxu0 0.0
      %841 = vmatpush1.msra.mxu0 0.0
      %842 = vmatprep.subr.mxu0 0.0
      %843 = vmatpush1.msra.mxu0 0.0
      %844 = vmatprep.subr.mxu0 0.0
      %845 = vmatpush1.msra.mxu0 0.0
      %846 = vmatprep.subr.mxu0 0.0
      %847 = vmatpush1.msra.mxu0 0.0
      %848 = vmatprep.subr.mxu0 0.0
      %849 = vmatpush1.msra.mxu0 0.0
      %850 = vmatprep.subr.mxu0 0.0
      %851 = vmatpush1.msra.mxu0 0.0
      %852 = vmatprep.subr.mxu0 0.0
      %853 = vmatpush1.msra.mxu0 0.0
      %854 = vmatprep.subr.mxu0 0.0
      %855 = vmatpush1.msra.mxu0 0.0
      %856 = vmatprep.subr.mxu0 0.0
      %857 = vmatpush1.msra.mxu0 0.0
      %858 = vmatprep.subr.mxu0 0.0
      %859 = vmatpush1.msra.mxu0 0.0
      %860 = vmatprep.subr.mxu0 0.0
      %861 = vmatpush1.msra.mxu0 0.0
      %862 = vmatprep.subr.mxu0 0.0
      %863 = vmatpush1.msra.mxu0 0.0
      %864 = vmatprep.subr.mxu0 0.0
      %865 = vmatpush1.msra.mxu0 0.0
      %866 = vmatprep.subr.mxu0 0.0
      %867 = vmatpush1.msra.mxu0 0.0
      %868 = vmatprep.subr.mxu0 0.0
      %869 = vmatpush1.msra.mxu0 0.0
      %870 = vmatprep.subr.mxu0 0.0
      %871 = vmatpush1.msra.mxu0 0.0
      %872 = vmatprep.subr.mxu0 0.0
      %873 = vmatpush1.msra.mxu0 0.0
      %874 = vmatprep.subr.mxu0 0.0
      %875 = vmatpush1.msra.mxu0 0.0
      %876 = vmatprep.subr.mxu0 0.0
      %877 = vmatpush1.msra.mxu0 0.0
      %878 = vmatprep.subr.mxu0 0.0
      %879 = vmatpush1.msra.mxu0 0.0
      %880 = vmatprep.subr.mxu0 0.0
      %881 = vmatpush1.msra.mxu0 0.0
      %882 = vmatprep.subr.mxu0 0.0
      %883 = vmatpush1.msra.mxu0 0.0
      %884 = vmatprep.subr.mxu0 0.0
      %885 = vmatpush1.msra.mxu0 0.0
      %886 = vmatprep.subr.mxu0 0.0
      %887 = vmatpush1.msra.mxu0 0.0
      %888 = vmatprep.subr.mxu0 0.0
      %889 = vmatpush1.msra.mxu0 0.0
      %890 = vmatprep.subr.mxu0 0.0
      %891 = vmatpush1.msra.mxu0 0.0
      %892 = vmatprep.subr.mxu0 0.0
      %893 = vmatpush1.msra.mxu0 0.0
      %894 = vmatprep.subr.mxu0 0.0
      %895 = vmatpush1.msra.mxu0 0.0
      %896 = vmatprep.subr.mxu0 0.0
      %897 = vmatpush1.msra.mxu0 0.0
      %898 = vmatprep.subr.mxu0 0.0
      %899 = vmatpush1.msra.mxu0 0.0
      %900 = vmatprep.mubr.f32.mxu0 0.0
      %901 = vmatmul.mubr.f32.gmra.mrb[0].mxu0 %v831
      %v902 = vpop.f32.mrb[0].mxu0
      %v903 = vadd.f32 0.0, %v902
      %v904 = vpop.f32.mrb[0].mxu0
      %905 = vmatprep.mubr.f32.mxu0 0.0
      %906 = vmatmul.mubr.f32.gmra.mrb[0].mxu0 %v834
      %v907 = vpop.f32.mrb[0].mxu0
      %v908 = vadd.f32 0.0, %v907
      %v909 = vpop.f32.mrb[0].mxu0
      %910 = vdwg.mxu0
      %v911 = vadd.f32 %v743, %v747
      %v912 = vadd.f32 %v744, %v748
      %v914 = vsel %vm497, %v465, 0
      %v917 = vsel %vm497, %v466, 0
      %919 = vmatprep.subr.mxu0 0.0
      %920 = vmatpush1.msra.mxu0 %v911
      %921 = vmatprep.subr.mxu0 0.0
      %922 = vmatpush1.msra.mxu0 %v912
      %923 = vmatprep.subr.mxu0 0.0
      %924 = vmatpush1.msra.mxu0 0.0
      %925 = vmatprep.subr.mxu0 0.0
      %926 = vmatpush1.msra.mxu0 0.0
      %927 = vmatprep.subr.mxu0 0.0
      %928 = vmatpush1.msra.mxu0 0.0
      %929 = vmatprep.subr.mxu0 0.0
      %930 = vmatpush1.msra.mxu0 0.0
      %931 = vmatprep.subr.mxu0 0.0
      %932 = vmatpush1.msra.mxu0 0.0
      %933 = vmatprep.subr.mxu0 0.0
      %934 = vmatpush1.msra.mxu0 0.0
      %935 = vmatprep.subr.mxu0 0.0
      %936 = vmatpush1.msra.mxu0 0.0
      %937 = vmatprep.subr.mxu0 0.0
      %938 = vmatpush1.msra.mxu0 0.0
      %939 = vmatprep.subr.mxu0 0.0
      %940 = vmatpush1.msra.mxu0 0.0
      %941 = vmatprep.subr.mxu0 0.0
      %942 = vmatpush1.msra.mxu0 0.0
      %943 = vmatprep.subr.mxu0 0.0
      %944 = vmatpush1.msra.mxu0 0.0
      %945 = vmatprep.subr.mxu0 0.0
      %946 = vmatpush1.msra.mxu0 0.0
      %947 = vmatprep.subr.mxu0 0.0
      %948 = vmatpush1.msra.mxu0 0.0
      %949 = vmatprep.subr.mxu0 0.0
      %950 = vmatpush1.msra.mxu0 0.0
      %951 = vmatprep.subr.mxu0 0.0
      %952 = vmatpush1.msra.mxu0 0.0
      %953 = vmatprep.subr.mxu0 0.0
      %954 = vmatpush1.msra.mxu0 0.0
      %955 = vmatprep.subr.mxu0 0.0
      %956 = vmatpush1.msra.mxu0 0.0
      %957 = vmatprep.subr.mxu0 0.0
      %958 = vmatpush1.msra.mxu0 0.0
      %959 = vmatprep.subr.mxu0 0.0
      %960 = vmatpush1.msra.mxu0 0.0
      %961 = vmatprep.subr.mxu0 0.0
      %962 = vmatpush1.msra.mxu0 0.0
      %963 = vmatprep.subr.mxu0 0.0
      %964 = vmatpush1.msra.mxu0 0.0
      %965 = vmatprep.subr.mxu0 0.0
      %966 = vmatpush1.msra.mxu0 0.0
      %967 = vmatprep.subr.mxu0 0.0
      %968 = vmatpush1.msra.mxu0 0.0
      %969 = vmatprep.subr.mxu0 0.0
      %970 = vmatpush1.msra.mxu0 0.0
      %971 = vmatprep.subr.mxu0 0.0
      %972 = vmatpush1.msra.mxu0 0.0
      %973 = vmatprep.subr.mxu0 0.0
      %974 = vmatpush1.msra.mxu0 0.0
      %975 = vmatprep.subr.mxu0 0.0
      %976 = vmatpush1.msra.mxu0 0.0
      %977 = vmatprep.subr.mxu0 0.0
      %978 = vmatpush1.msra.mxu0 0.0
      %979 = vmatprep.subr.mxu0 0.0
      %980 = vmatpush1.msra.mxu0 0.0
      %981 = vmatprep.subr.mxu0 0.0
      %982 = vmatpush1.msra.mxu0 0.0
      %983 = vmatprep.mubr.f32.mxu0 0.0
      %984 = vmatmul.mubr.f32.gmra.mrb[0].mxu0 %v914
      %v985 = vpop.f32.mrb[0].mxu0
      %v986 = vadd.f32 0.0, %v985
      %v987 = vpop.f32.mrb[0].mxu0
      %988 = vmatprep.mubr.f32.mxu0 0.0
      %989 = vmatmul.mubr.f32.gmra.mrb[0].mxu0 %v917
      %v990 = vpop.f32.mrb[0].mxu0
      %v991 = vadd.f32 0.0, %v990
      %v992 = vpop.f32.mrb[0].mxu0
      %993 = vdwg.mxu0
      %v994 = vsub.f32 %v822, %v903
      %v995 = vsub.f32 %v827, %v908
      %v996 = vsub.f32 %v986, %v822
      %v997 = vsub.f32 %v991, %v827
      %v998 = vsub.f32 %v996, %v903
      %v999 = vsub.f32 %v997, %v908
      %v1000 = vld [vmem:[%s436] sm:$0xff]
      %v1001 = vld [vmem:[%s436 + $0x8] sm:$0xff]
      %v1002 = vadd.f32 %v1000, %v994
      %v1003 = vadd.f32 %v1001, %v995
      %v1004 = vmul.f32 %v1002, %v491
      %v1005 = vmul.f32 %v1003, %v492
      %v1006 = vld [vmem:[%s443] sm:$0xff]
      %v1007 = vld [vmem:[%s443 + $0x8] sm:$0xff]
      %v1008 = vadd.f32 %v1006, %v998
      %v1009 = vadd.f32 %v1007, %v999
      %v1010 = vmul.f32 %v1008, %v491
      %v1011 = vmul.f32 %v1009, %v492
      %v1013 = vsel %vm497, %v1004, 0
      %v1016 = vsel %vm497, %v1005, 0
      %1018 = vmatprep.subr.mxu0 0.0
      %1019 = vmatpush1.msra.mxu0 %v483
      %1020 = vmatprep.subr.mxu0 0.0
      %1021 = vmatpush1.msra.mxu0 %v484
      %1022 = vmatprep.subr.mxu0 0.0
      %1023 = vmatpush1.msra.mxu0 0.0
      %1024 = vmatprep.subr.mxu0 0.0
      %1025 = vmatpush1.msra.mxu0 0.0
      %1026 = vmatprep.subr.mxu0 0.0
      %1027 = vmatpush1.msra.mxu0 0.0
      %1028 = vmatprep.subr.mxu0 0.0
      %1029 = vmatpush1.msra.mxu0 0.0
      %1030 = vmatprep.subr.mxu0 0.0
      %1031 = vmatpush1.msra.mxu0 0.0
      %1032 = vmatprep.subr.mxu0 0.0
      %1033 = vmatpush1.msra.mxu0 0.0
      %1034 = vmatprep.subr.mxu0 0.0
      %1035 = vmatpush1.msra.mxu0 0.0
      %1036 = vmatprep.subr.mxu0 0.0
      %1037 = vmatpush1.msra.mxu0 0.0
      %1038 = vmatprep.subr.mxu0 0.0
      %1039 = vmatpush1.msra.mxu0 0.0
      %1040 = vmatprep.subr.mxu0 0.0
      %1041 = vmatpush1.msra.mxu0 0.0
      %1042 = vmatprep.subr.mxu0 0.0
      %1043 = vmatpush1.msra.mxu0 0.0
      %1044 = vmatprep.subr.mxu0 0.0
      %1045 = vmatpush1.msra.mxu0 0.0
      %1046 = vmatprep.subr.mxu0 0.0
      %1047 = vmatpush1.msra.mxu0 0.0
      %1048 = vmatprep.subr.mxu0 0.0
      %1049 = vmatpush1.msra.mxu0 0.0
      %1050 = vmatprep.subr.mxu0 0.0
      %1051 = vmatpush1.msra.mxu0 0.0
      %1052 = vmatprep.subr.mxu0 0.0
      %1053 = vmatpush1.msra.mxu0 0.0
      %1054 = vmatprep.subr.mxu0 0.0
      %1055 = vmatpush1.msra.mxu0 0.0
      %1056 = vmatprep.subr.mxu0 0.0
      %1057 = vmatpush1.msra.mxu0 0.0
      %1058 = vmatprep.subr.mxu0 0.0
      %1059 = vmatpush1.msra.mxu0 0.0
      %1060 = vmatprep.subr.mxu0 0.0
      %1061 = vmatpush1.msra.mxu0 0.0
      %1062 = vmatprep.subr.mxu0 0.0
      %1063 = vmatpush1.msra.mxu0 0.0
      %1064 = vmatprep.subr.mxu0 0.0
      %1065 = vmatpush1.msra.mxu0 0.0
      %1066 = vmatprep.subr.mxu0 0.0
      %1067 = vmatpush1.msra.mxu0 0.0
      %1068 = vmatprep.subr.mxu0 0.0
      %1069 = vmatpush1.msra.mxu0 0.0
      %1070 = vmatprep.subr.mxu0 0.0
      %1071 = vmatpush1.msra.mxu0 0.0
      %1072 = vmatprep.subr.mxu0 0.0
      %1073 = vmatpush1.msra.mxu0 0.0
      %1074 = vmatprep.subr.mxu0 0.0
      %1075 = vmatpush1.msra.mxu0 0.0
      %1076 = vmatprep.subr.mxu0 0.0
      %1077 = vmatpush1.msra.mxu0 0.0
      %1078 = vmatprep.subr.mxu0 0.0
      %1079 = vmatpush1.msra.mxu0 0.0
      %1080 = vmatprep.subr.mxu0 0.0
      %1081 = vmatpush1.msra.mxu0 0.0
      %1082 = vmatprep.mubr.f32.mxu0 0.0
      %1083 = vmatmul.mubr.f32.gmra.mrb[0].mxu0 %v1013
      %v1084 = vpop.f32.mrb[0].mxu0
      %v1085 = vadd.f32 0.0, %v1084
      %v1086 = vpop.f32.mrb[0].mxu0
      %1087 = vmatprep.mubr.f32.mxu0 0.0
      %1088 = vmatmul.mubr.f32.gmra.mrb[0].mxu0 %v1016
      %v1089 = vpop.f32.mrb[0].mxu0
      %v1090 = vadd.f32 0.0, %v1089
      %v1091 = vpop.f32.mrb[0].mxu0
      %1092 = vdwg.mxu0
      %v1094 = vsel %vm497, %v1010, 0
      %v1097 = vsel %vm497, %v1011, 0
      %1099 = vmatprep.subr.mxu0 0.0
      %1100 = vmatpush1.msra.mxu0 %v486
      %1101 = vmatprep.subr.mxu0 0.0
      %1102 = vmatpush1.msra.mxu0 %v487
      %1103 = vmatprep.subr.mxu0 0.0
      %1104 = vmatpush1.msra.mxu0 0.0
      %1105 = vmatprep.subr.mxu0 0.0
      %1106 = vmatpush1.msra.mxu0 0.0
      %1107 = vmatprep.subr.mxu0 0.0
      %1108 = vmatpush1.msra.mxu0 0.0
      %1109 = vmatprep.subr.mxu0 0.0
      %1110 = vmatpush1.msra.mxu0 0.0
      %1111 = vmatprep.subr.mxu0 0.0
      %1112 = vmatpush1.msra.mxu0 0.0
      %1113 = vmatprep.subr.mxu0 0.0
      %1114 = vmatpush1.msra.mxu0 0.0
      %1115 = vmatprep.subr.mxu0 0.0
      %1116 = vmatpush1.msra.mxu0 0.0
      %1117 = vmatprep.subr.mxu0 0.0
      %1118 = vmatpush1.msra.mxu0 0.0
      %1119 = vmatprep.subr.mxu0 0.0
      %1120 = vmatpush1.msra.mxu0 0.0
      %1121 = vmatprep.subr.mxu0 0.0
      %1122 = vmatpush1.msra.mxu0 0.0
      %1123 = vmatprep.subr.mxu0 0.0
      %1124 = vmatpush1.msra.mxu0 0.0
      %1125 = vmatprep.subr.mxu0 0.0
      %1126 = vmatpush1.msra.mxu0 0.0
      %1127 = vmatprep.subr.mxu0 0.0
      %1128 = vmatpush1.msra.mxu0 0.0
      %1129 = vmatprep.subr.mxu0 0.0
      %1130 = vmatpush1.msra.mxu0 0.0
      %1131 = vmatprep.subr.mxu0 0.0
      %1132 = vmatpush1.msra.mxu0 0.0
      %1133 = vmatprep.subr.mxu0 0.0
      %1134 = vmatpush1.msra.mxu0 0.0
      %1135 = vmatprep.subr.mxu0 0.0
      %1136 = vmatpush1.msra.mxu0 0.0
      %1137 = vmatprep.subr.mxu0 0.0
      %1138 = vmatpush1.msra.mxu0 0.0
      %1139 = vmatprep.subr.mxu0 0.0
      %1140 = vmatpush1.msra.mxu0 0.0
      %1141 = vmatprep.subr.mxu0 0.0
      %1142 = vmatpush1.msra.mxu0 0.0
      %1143 = vmatprep.subr.mxu0 0.0
      %1144 = vmatpush1.msra.mxu0 0.0
      %1145 = vmatprep.subr.mxu0 0.0
      %1146 = vmatpush1.msra.mxu0 0.0
      %1147 = vmatprep.subr.mxu0 0.0
      %1148 = vmatpush1.msra.mxu0 0.0
      %1149 = vmatprep.subr.mxu0 0.0
      %1150 = vmatpush1.msra.mxu0 0.0
      %1151 = vmatprep.subr.mxu0 0.0
      %1152 = vmatpush1.msra.mxu0 0.0
      %1153 = vmatprep.subr.mxu0 0.0
      %1154 = vmatpush1.msra.mxu0 0.0
      %1155 = vmatprep.subr.mxu0 0.0
      %1156 = vmatpush1.msra.mxu0 0.0
      %1157 = vmatprep.subr.mxu0 0.0
      %1158 = vmatpush1.msra.mxu0 0.0
      %1159 = vmatprep.subr.mxu0 0.0
      %1160 = vmatpush1.msra.mxu0 0.0
      %1161 = vmatprep.subr.mxu0 0.0
      %1162 = vmatpush1.msra.mxu0 0.0
      %1163 = vmatprep.mubr.f32.mxu0 0.0
      %1164 = vmatmul.mubr.f32.gmra.mrb[0].mxu0 %v1094
      %v1165 = vpop.f32.mrb[0].mxu0
      %v1166 = vadd.f32 0.0, %v1165
      %v1167 = vpop.f32.mrb[0].mxu0
      %1168 = vmatprep.mubr.f32.mxu0 0.0
      %1169 = vmatmul.mubr.f32.gmra.mrb[0].mxu0 %v1097
      %v1170 = vpop.f32.mrb[0].mxu0
      %v1171 = vadd.f32 0.0, %v1170
      %v1172 = vpop.f32.mrb[0].mxu0
      %1173 = vdwg.mxu0
      %v1174 = vadd.f32 %v1004, %v1010
      %v1175 = vadd.f32 %v1005, %v1011
      %v1177 = vsel %vm497, %v1174, 0
      %v1180 = vsel %vm497, %v1175, 0
      %1182 = vmatprep.subr.mxu0 0.0
      %1183 = vmatpush1.msra.mxu0 %v489
      %1184 = vmatprep.subr.mxu0 0.0
      %1185 = vmatpush1.msra.mxu0 %v490
      %1186 = vmatprep.subr.mxu0 0.0
      %1187 = vmatpush1.msra.mxu0 0.0
      %1188 = vmatprep.subr.mxu0 0.0
      %1189 = vmatpush1.msra.mxu0 0.0
      %1190 = vmatprep.subr.mxu0 0.0
      %1191 = vmatpush1.msra.mxu0 0.0
      %1192 = vmatprep.subr.mxu0 0.0
      %1193 = vmatpush1.msra.mxu0 0.0
      %1194 = vmatprep.subr.mxu0 0.0
      %1195 = vmatpush1.msra.mxu0 0.0
      %1196 = vmatprep.subr.mxu0 0.0
      %1197 = vmatpush1.msra.mxu0 0.0
      %1198 = vmatprep.subr.mxu0 0.0
      %1199 = vmatpush1.msra.mxu0 0.0
      %1200 = vmatprep.subr.mxu0 0.0
      %1201 = vmatpush1.msra.mxu0 0.0
      %1202 = vmatprep.subr.mxu0 0.0
      %1203 = vmatpush1.msra.mxu0 0.0
      %1204 = vmatprep.subr.mxu0 0.0
      %1205 = vmatpush1.msra.mxu0 0.0
      %1206 = vmatprep.subr.mxu0 0.0
      %1207 = vmatpush1.msra.mxu0 0.0
      %1208 = vmatprep.subr.mxu0 0.0
      %1209 = vmatpush1.msra.mxu0 0.0
      %1210 = vmatprep.subr.mxu0 0.0
      %1211 = vmatpush1.msra.mxu0 0.0
      %1212 = vmatprep.subr.mxu0 0.0
      %1213 = vmatpush1.msra.mxu0 0.0
      %1214 = vmatprep.subr.mxu0 0.0
      %1215 = vmatpush1.msra.mxu0 0.0
      %1216 = vmatprep.subr.mxu0 0.0
      %1217 = vmatpush1.msra.mxu0 0.0
      %1218 = vmatprep.subr.mxu0 0.0
      %1219 = vmatpush1.msra.mxu0 0.0
      %1220 = vmatprep.subr.mxu0 0.0
      %1221 = vmatpush1.msra.mxu0 0.0
      %1222 = vmatprep.subr.mxu0 0.0
      %1223 = vmatpush1.msra.mxu0 0.0
      %1224 = vmatprep.subr.mxu0 0.0
      %1225 = vmatpush1.msra.mxu0 0.0
      %1226 = vmatprep.subr.mxu0 0.0
      %1227 = vmatpush1.msra.mxu0 0.0
      %1228 = vmatprep.subr.mxu0 0.0
      %1229 = vmatpush1.msra.mxu0 0.0
      %1230 = vmatprep.subr.mxu0 0.0
      %1231 = vmatpush1.msra.mxu0 0.0
      %1232 = vmatprep.subr.mxu0 0.0
      %1233 = vmatpush1.msra.mxu0 0.0
      %1234 = vmatprep.subr.mxu0 0.0
      %1235 = vmatpush1.msra.mxu0 0.0
      %1236 = vmatprep.subr.mxu0 0.0
      %1237 = vmatpush1.msra.mxu0 0.0
      %1238 = vmatprep.subr.mxu0 0.0
      %1239 = vmatpush1.msra.mxu0 0.0
      %1240 = vmatprep.subr.mxu0 0.0
      %1241 = vmatpush1.msra.mxu0 0.0
      %1242 = vmatprep.subr.mxu0 0.0
      %1243 = vmatpush1.msra.mxu0 0.0
      %1244 = vmatprep.subr.mxu0 0.0
      %1245 = vmatpush1.msra.mxu0 0.0
      %1246 = vmatprep.mubr.f32.mxu0 0.0
      %1247 = vmatmul.mubr.f32.gmra.mrb[0].mxu0 %v1177
      %v1248 = vpop.f32.mrb[0].mxu0
      %v1249 = vadd.f32 0.0, %v1248
      %v1250 = vpop.f32.mrb[0].mxu0
      %1251 = vmatprep.mubr.f32.mxu0 0.0
      %1252 = vmatmul.mubr.f32.gmra.mrb[0].mxu0 %v1180
      %v1253 = vpop.f32.mrb[0].mxu0
      %v1254 = vadd.f32 0.0, %v1253
      %v1255 = vpop.f32.mrb[0].mxu0
      %1256 = vdwg.mxu0
      %v1257 = vsub.f32 %v1085, %v1166
      %v1258 = vsub.f32 %v1090, %v1171
      %v1259 = vsub.f32 %v1249, %v1085
      %v1260 = vsub.f32 %v1254, %v1090
      %v1261 = vsub.f32 %v1259, %v1166
      %v1262 = vsub.f32 %v1260, %v1171
      %v1264 = vsel %vm497, %v475, 0
      %v1267 = vsel %vm497, %v476, 0
      %1269 = vmatprep.subr.mxu0 0.0
      %1270 = vmatpush1.msra.mxu0 %v1257
      %1271 = vmatprep.subr.mxu0 0.0
      %1272 = vmatpush1.msra.mxu0 %v1258
      %1273 = vmatprep.subr.mxu0 0.0
      %1274 = vmatpush1.msra.mxu0 0.0
      %1275 = vmatprep.subr.mxu0 0.0
      %1276 = vmatpush1.msra.mxu0 0.0
      %1277 = vmatprep.subr.mxu0 0.0
      %1278 = vmatpush1.msra.mxu0 0.0
      %1279 = vmatprep.subr.mxu0 0.0
      %1280 = vmatpush1.msra.mxu0 0.0
      %1281 = vmatprep.subr.mxu0 0.0
      %1282 = vmatpush1.msra.mxu0 0.0
      %1283 = vmatprep.subr.mxu0 0.0
      %1284 = vmatpush1.msra.mxu0 0.0
      %1285 = vmatprep.subr.mxu0 0.0
      %1286 = vmatpush1.msra.mxu0 0.0
      %1287 = vmatprep.subr.mxu0 0.0
      %1288 = vmatpush1.msra.mxu0 0.0
      %1289 = vmatprep.subr.mxu0 0.0
      %1290 = vmatpush1.msra.mxu0 0.0
      %1291 = vmatprep.subr.mxu0 0.0
      %1292 = vmatpush1.msra.mxu0 0.0
      %1293 = vmatprep.subr.mxu0 0.0
      %1294 = vmatpush1.msra.mxu0 0.0
      %1295 = vmatprep.subr.mxu0 0.0
      %1296 = vmatpush1.msra.mxu0 0.0
      %1297 = vmatprep.subr.mxu0 0.0
      %1298 = vmatpush1.msra.mxu0 0.0
      %1299 = vmatprep.subr.mxu0 0.0
      %1300 = vmatpush1.msra.mxu0 0.0
      %1301 = vmatprep.subr.mxu0 0.0
      %1302 = vmatpush1.msra.mxu0 0.0
      %1303 = vmatprep.subr.mxu0 0.0
      %1304 = vmatpush1.msra.mxu0 0.0
      %1305 = vmatprep.subr.mxu0 0.0
      %1306 = vmatpush1.msra.mxu0 0.0
      %1307 = vmatprep.subr.mxu0 0.0
      %1308 = vmatpush1.msra.mxu0 0.0
      %1309 = vmatprep.subr.mxu0 0.0
      %1310 = vmatpush1.msra.mxu0 0.0
      %1311 = vmatprep.subr.mxu0 0.0
      %1312 = vmatpush1.msra.mxu0 0.0
      %1313 = vmatprep.subr.mxu0 0.0
      %1314 = vmatpush1.msra.mxu0 0.0
      %1315 = vmatprep.subr.mxu0 0.0
      %1316 = vmatpush1.msra.mxu0 0.0
      %1317 = vmatprep.subr.mxu0 0.0
      %1318 = vmatpush1.msra.mxu0 0.0
      %1319 = vmatprep.subr.mxu0 0.0
      %1320 = vmatpush1.msra.mxu0 0.0
      %1321 = vmatprep.subr.mxu0 0.0
      %1322 = vmatpush1.msra.mxu0 0.0
      %1323 = vmatprep.subr.mxu0 0.0
      %1324 = vmatpush1.msra.mxu0 0.0
      %1325 = vmatprep.subr.mxu0 0.0
      %1326 = vmatpush1.msra.mxu0 0.0
      %1327 = vmatprep.subr.mxu0 0.0
      %1328 = vmatpush1.msra.mxu0 0.0
      %1329 = vmatprep.subr.mxu0 0.0
      %1330 = vmatpush1.msra.mxu0 0.0
      %1331 = vmatprep.subr.mxu0 0.0
      %1332 = vmatpush1.msra.mxu0 0.0
      %1333 = vmatprep.mubr.f32.mxu0 0.0
      %1334 = vmatmul.mubr.f32.gmra.mrb[0].mxu0 %v1264
      %v1335 = vpop.f32.mrb[0].mxu0
      %v1336 = vadd.f32 0.0, %v1335
      %v1337 = vpop.f32.mrb[0].mxu0
      %1338 = vmatprep.mubr.f32.mxu0 0.0
      %1339 = vmatmul.mubr.f32.gmra.mrb[0].mxu0 %v1267
      %v1340 = vpop.f32.mrb[0].mxu0
      %v1341 = vadd.f32 0.0, %v1340
      %v1342 = vpop.f32.mrb[0].mxu0
      %1343 = vdwg.mxu0
      %v1345 = vsel %vm497, %v478, 0
      %v1348 = vsel %vm497, %v479, 0
      %1350 = vmatprep.subr.mxu0 0.0
      %1351 = vmatpush1.msra.mxu0 %v1261
      %1352 = vmatprep.subr.mxu0 0.0
      %1353 = vmatpush1.msra.mxu0 %v1262
      %1354 = vmatprep.subr.mxu0 0.0
      %1355 = vmatpush1.msra.mxu0 0.0
      %1356 = vmatprep.subr.mxu0 0.0
      %1357 = vmatpush1.msra.mxu0 0.0
      %1358 = vmatprep.subr.mxu0 0.0
      %1359 = vmatpush1.msra.mxu0 0.0
      %1360 = vmatprep.subr.mxu0 0.0
      %1361 = vmatpush1.msra.mxu0 0.0
      %1362 = vmatprep.subr.mxu0 0.0
      %1363 = vmatpush1.msra.mxu0 0.0
      %1364 = vmatprep.subr.mxu0 0.0
      %1365 = vmatpush1.msra.mxu0 0.0
      %1366 = vmatprep.subr.mxu0 0.0
      %1367 = vmatpush1.msra.mxu0 0.0
      %1368 = vmatprep.subr.mxu0 0.0
      %1369 = vmatpush1.msra.mxu0 0.0
      %1370 = vmatprep.subr.mxu0 0.0
      %1371 = vmatpush1.msra.mxu0 0.0
      %1372 = vmatprep.subr.mxu0 0.0
      %1373 = vmatpush1.msra.mxu0 0.0
      %1374 = vmatprep.subr.mxu0 0.0
      %1375 = vmatpush1.msra.mxu0 0.0
      %1376 = vmatprep.subr.mxu0 0.0
      %1377 = vmatpush1.msra.mxu0 0.0
      %1378 = vmatprep.subr.mxu0 0.0
      %1379 = vmatpush1.msra.mxu0 0.0
      %1380 = vmatprep.subr.mxu0 0.0
      %1381 = vmatpush1.msra.mxu0 0.0
      %1382 = vmatprep.subr.mxu0 0.0
      %1383 = vmatpush1.msra.mxu0 0.0
      %1384 = vmatprep.subr.mxu0 0.0
      %1385 = vmatpush1.msra.mxu0 0.0
      %1386 = vmatprep.subr.mxu0 0.0
      %1387 = vmatpush1.msra.mxu0 0.0
      %1388 = vmatprep.subr.mxu0 0.0
      %1389 = vmatpush1.msra.mxu0 0.0
      %1390 = vmatprep.subr.mxu0 0.0
      %1391 = vmatpush1.msra.mxu0 0.0
      %1392 = vmatprep.subr.mxu0 0.0
      %1393 = vmatpush1.msra.mxu0 0.0
      %1394 = vmatprep.subr.mxu0 0.0
      %1395 = vmatpush1.msra.mxu0 0.0
      %1396 = vmatprep.subr.mxu0 0.0
      %1397 = vmatpush1.msra.mxu0 0.0
      %1398 = vmatprep.subr.mxu0 0.0
      %1399 = vmatpush1.msra.mxu0 0.0
      %1400 = vmatprep.subr.mxu0 0.0
      %1401 = vmatpush1.msra.mxu0 0.0
      %1402 = vmatprep.subr.mxu0 0.0
      %1403 = vmatpush1.msra.mxu0 0.0
      %1404 = vmatprep.subr.mxu0 0.0
      %1405 = vmatpush1.msra.mxu0 0.0
      %1406 = vmatprep.subr.mxu0 0.0
      %1407 = vmatpush1.msra.mxu0 0.0
      %1408 = vmatprep.subr.mxu0 0.0
      %1409 = vmatpush1.msra.mxu0 0.0
      %1410 = vmatprep.subr.mxu0 0.0
      %1411 = vmatpush1.msra.mxu0 0.0
      %1412 = vmatprep.subr.mxu0 0.0
      %1413 = vmatpush1.msra.mxu0 0.0
      %1414 = vmatprep.mubr.f32.mxu0 0.0
      %1415 = vmatmul.mubr.f32.gmra.mrb[0].mxu0 %v1345
      %v1416 = vpop.f32.mrb[0].mxu0
      %v1417 = vadd.f32 0.0, %v1416
      %v1418 = vpop.f32.mrb[0].mxu0
      %1419 = vmatprep.mubr.f32.mxu0 0.0
      %1420 = vmatmul.mubr.f32.gmra.mrb[0].mxu0 %v1348
      %v1421 = vpop.f32.mrb[0].mxu0
      %v1422 = vadd.f32 0.0, %v1421
      %v1423 = vpop.f32.mrb[0].mxu0
      %1424 = vdwg.mxu0
      %v1425 = vadd.f32 %v1257, %v1261
      %v1426 = vadd.f32 %v1258, %v1262
      %v1428 = vsel %vm497, %v481, 0
      %v1431 = vsel %vm497, %v482, 0
      %1433 = vmatprep.subr.mxu0 0.0
      %1434 = vmatpush1.msra.mxu0 %v1425
      %1435 = vmatprep.subr.mxu0 0.0
      %1436 = vmatpush1.msra.mxu0 %v1426
      %1437 = vmatprep.subr.mxu0 0.0
      %1438 = vmatpush1.msra.mxu0 0.0
      %1439 = vmatprep.subr.mxu0 0.0
      %1440 = vmatpush1.msra.mxu0 0.0
      %1441 = vmatprep.subr.mxu0 0.0
      %1442 = vmatpush1.msra.mxu0 0.0
      %1443 = vmatprep.subr.mxu0 0.0
      %1444 = vmatpush1.msra.mxu0 0.0
      %1445 = vmatprep.subr.mxu0 0.0
      %1446 = vmatpush1.msra.mxu0 0.0
      %1447 = vmatprep.subr.mxu0 0.0
      %1448 = vmatpush1.msra.mxu0 0.0
      %1449 = vmatprep.subr.mxu0 0.0
      %1450 = vmatpush1.msra.mxu0 0.0
      %1451 = vmatprep.subr.mxu0 0.0
      %1452 = vmatpush1.msra.mxu0 0.0
      %1453 = vmatprep.subr.mxu0 0.0
      %1454 = vmatpush1.msra.mxu0 0.0
      %1455 = vmatprep.subr.mxu0 0.0
      %1456 = vmatpush1.msra.mxu0 0.0
      %1457 = vmatprep.subr.mxu0 0.0
      %1458 = vmatpush1.msra.mxu0 0.0
      %1459 = vmatprep.subr.mxu0 0.0
      %1460 = vmatpush1.msra.mxu0 0.0
      %1461 = vmatprep.subr.mxu0 0.0
      %1462 = vmatpush1.msra.mxu0 0.0
      %1463 = vmatprep.subr.mxu0 0.0
      %1464 = vmatpush1.msra.mxu0 0.0
      %1465 = vmatprep.subr.mxu0 0.0
      %1466 = vmatpush1.msra.mxu0 0.0
      %1467 = vmatprep.subr.mxu0 0.0
      %1468 = vmatpush1.msra.mxu0 0.0
      %1469 = vmatprep.subr.mxu0 0.0
      %1470 = vmatpush1.msra.mxu0 0.0
      %1471 = vmatprep.subr.mxu0 0.0
      %1472 = vmatpush1.msra.mxu0 0.0
      %1473 = vmatprep.subr.mxu0 0.0
      %1474 = vmatpush1.msra.mxu0 0.0
      %1475 = vmatprep.subr.mxu0 0.0
      %1476 = vmatpush1.msra.mxu0 0.0
      %1477 = vmatprep.subr.mxu0 0.0
      %1478 = vmatpush1.msra.mxu0 0.0
      %1479 = vmatprep.subr.mxu0 0.0
      %1480 = vmatpush1.msra.mxu0 0.0
      %1481 = vmatprep.subr.mxu0 0.0
      %1482 = vmatpush1.msra.mxu0 0.0
      %1483 = vmatprep.subr.mxu0 0.0
      %1484 = vmatpush1.msra.mxu0 0.0
      %1485 = vmatprep.subr.mxu0 0.0
      %1486 = vmatpush1.msra.mxu0 0.0
      %1487 = vmatprep.subr.mxu0 0.0
      %1488 = vmatpush1.msra.mxu0 0.0
      %1489 = vmatprep.subr.mxu0 0.0
      %1490 = vmatpush1.msra.mxu0 0.0
      %1491 = vmatprep.subr.mxu0 0.0
      %1492 = vmatpush1.msra.mxu0 0.0
      %1493 = vmatprep.subr.mxu0 0.0
      %1494 = vmatpush1.msra.mxu0 0.0
      %1495 = vmatprep.subr.mxu0 0.0
      %1496 = vmatpush1.msra.mxu0 0.0
      %1497 = vmatprep.mubr.f32.mxu0 0.0
      %1498 = vmatmul.mubr.f32.gmra.mrb[0].mxu0 %v1428
      %v1499 = vpop.f32.mrb[0].mxu0
      %v1500 = vadd.f32 0.0, %v1499
      %v1501 = vpop.f32.mrb[0].mxu0
      %1502 = vmatprep.mubr.f32.mxu0 0.0
      %1503 = vmatmul.mubr.f32.gmra.mrb[0].mxu0 %v1431
      %v1504 = vpop.f32.mrb[0].mxu0
      %v1505 = vadd.f32 0.0, %v1504
      %v1506 = vpop.f32.mrb[0].mxu0
      %1507 = vdwg.mxu0
      %v1508 = vsub.f32 %v1336, %v1417
      %v1509 = vsub.f32 %v1341, %v1422
      %v1510 = vsub.f32 %v1500, %v1336
      %v1511 = vsub.f32 %v1505, %v1341
      %v1512 = vsub.f32 %v1510, %v1417
      %v1513 = vsub.f32 %v1511, %v1422
      %1514 = vst.msk [vmem:[%s450] sm:$0xff] %vm497, %v1508
      %1515 = vst.msk [vmem:[%s450 + $0x8] sm:$0xff] %vm497, %v1509
      %1516 = vst.msk [vmem:[%s457] sm:$0xff] %vm497, %v1512
      %1517 = vst.msk [vmem:[%s457 + $0x8] sm:$0xff] %vm497, %v1513
      %s1518 = scalar_lea.vmem %s422, 16
      %v1519 = vld [vmem:[%s1518] sm:$0xff]
      %v1520 = vld [vmem:[%s1518 + $0x8] sm:$0xff]
      %s1521 = scalar_lea.vmem %s429, 16
      %v1522 = vld [vmem:[%s1521] sm:$0xff]
      %v1523 = vld [vmem:[%s1521 + $0x8] sm:$0xff]
      %v1525 = vsel %vm497, %v1519, 0
      %v1528 = vsel %vm497, %v1520, 0
      %1530 = vmatprep.subr.mxu0 0.0
      %1531 = vmatpush1.msra.mxu0 %v467
      %1532 = vmatprep.subr.mxu0 0.0
      %1533 = vmatpush1.msra.mxu0 %v468
      %1534 = vmatprep.subr.mxu0 0.0
      %1535 = vmatpush1.msra.mxu0 0.0
      %1536 = vmatprep.subr.mxu0 0.0
      %1537 = vmatpush1.msra.mxu0 0.0
      %1538 = vmatprep.subr.mxu0 0.0
      %1539 = vmatpush1.msra.mxu0 0.0
      %1540 = vmatprep.subr.mxu0 0.0
      %1541 = vmatpush1.msra.mxu0 0.0
      %1542 = vmatprep.subr.mxu0 0.0
      %1543 = vmatpush1.msra.mxu0 0.0
      %1544 = vmatprep.subr.mxu0 0.0
      %1545 = vmatpush1.msra.mxu0 0.0
      %1546 = vmatprep.subr.mxu0 0.0
      %1547 = vmatpush1.msra.mxu0 0.0
      %1548 = vmatprep.subr.mxu0 0.0
      %1549 = vmatpush1.msra.mxu0 0.0
      %1550 = vmatprep.subr.mxu0 0.0
      %1551 = vmatpush1.msra.mxu0 0.0
      %1552 = vmatprep.subr.mxu0 0.0
      %1553 = vmatpush1.msra.mxu0 0.0
      %1554 = vmatprep.subr.mxu0 0.0
      %1555 = vmatpush1.msra.mxu0 0.0
      %1556 = vmatprep.subr.mxu0 0.0
      %1557 = vmatpush1.msra.mxu0 0.0
      %1558 = vmatprep.subr.mxu0 0.0
      %1559 = vmatpush1.msra.mxu0 0.0
      %1560 = vmatprep.subr.mxu0 0.0
      %1561 = vmatpush1.msra.mxu0 0.0
      %1562 = vmatprep.subr.mxu0 0.0
      %1563 = vmatpush1.msra.mxu0 0.0
      %1564 = vmatprep.subr.mxu0 0.0
      %1565 = vmatpush1.msra.mxu0 0.0
      %1566 = vmatprep.subr.mxu0 0.0
      %1567 = vmatpush1.msra.mxu0 0.0
      %1568 = vmatprep.subr.mxu0 0.0
      %1569 = vmatpush1.msra.mxu0 0.0
      %1570 = vmatprep.subr.mxu0 0.0
      %1571 = vmatpush1.msra.mxu0 0.0
      %1572 = vmatprep.subr.mxu0 0.0
      %1573 = vmatpush1.msra.mxu0 0.0
      %1574 = vmatprep.subr.mxu0 0.0
      %1575 = vmatpush1.msra.mxu0 0.0
      %1576 = vmatprep.subr.mxu0 0.0
      %1577 = vmatpush1.msra.mxu0 0.0
      %1578 = vmatprep.subr.mxu0 0.0
      %1579 = vmatpush1.msra.mxu0 0.0
      %1580 = vmatprep.subr.mxu0 0.0
      %1581 = vmatpush1.msra.mxu0 0.0
      %1582 = vmatprep.subr.mxu0 0.0
      %1583 = vmatpush1.msra.mxu0 0.0
      %1584 = vmatprep.subr.mxu0 0.0
      %1585 = vmatpush1.msra.mxu0 0.0
      %1586 = vmatprep.subr.mxu0 0.0
      %1587 = vmatpush1.msra.mxu0 0.0
      %1588 = vmatprep.subr.mxu0 0.0
      %1589 = vmatpush1.msra.mxu0 0.0
      %1590 = vmatprep.subr.mxu0 0.0
      %1591 = vmatpush1.msra.mxu0 0.0
      %1592 = vmatprep.subr.mxu0 0.0
      %1593 = vmatpush1.msra.mxu0 0.0
      %1594 = vmatprep.mubr.f32.mxu0 0.0
      %1595 = vmatmul.mubr.f32.gmra.mrb[0].mxu0 %v1525
      %v1596 = vpop.f32.mrb[0].mxu0
      %v1597 = vadd.f32 0.0, %v1596
      %v1598 = vpop.f32.mrb[0].mxu0
      %1599 = vmatprep.mubr.f32.mxu0 0.0
      %1600 = vmatmul.mubr.f32.gmra.mrb[0].mxu0 %v1528
      %v1601 = vpop.f32.mrb[0].mxu0
      %v1602 = vadd.f32 0.0, %v1601
      %v1603 = vpop.f32.mrb[0].mxu0
      %1604 = vdwg.mxu0
      %v1606 = vsel %vm497, %v1522, 0
      %v1609 = vsel %vm497, %v1523, 0
      %1611 = vmatprep.subr.mxu0 0.0
      %1612 = vmatpush1.msra.mxu0 %v470
      %1613 = vmatprep.subr.mxu0 0.0
      %1614 = vmatpush1.msra.mxu0 %v471
      %1615 = vmatprep.subr.mxu0 0.0
      %1616 = vmatpush1.msra.mxu0 0.0
      %1617 = vmatprep.subr.mxu0 0.0
      %1618 = vmatpush1.msra.mxu0 0.0
      %1619 = vmatprep.subr.mxu0 0.0
      %1620 = vmatpush1.msra.mxu0 0.0
      %1621 = vmatprep.subr.mxu0 0.0
      %1622 = vmatpush1.msra.mxu0 0.0
      %1623 = vmatprep.subr.mxu0 0.0
      %1624 = vmatpush1.msra.mxu0 0.0
      %1625 = vmatprep.subr.mxu0 0.0
      %1626 = vmatpush1.msra.mxu0 0.0
      %1627 = vmatprep.subr.mxu0 0.0
      %1628 = vmatpush1.msra.mxu0 0.0
      %1629 = vmatprep.subr.mxu0 0.0
      %1630 = vmatpush1.msra.mxu0 0.0
      %1631 = vmatprep.subr.mxu0 0.0
      %1632 = vmatpush1.msra.mxu0 0.0
      %1633 = vmatprep.subr.mxu0 0.0
      %1634 = vmatpush1.msra.mxu0 0.0
      %1635 = vmatprep.subr.mxu0 0.0
      %1636 = vmatpush1.msra.mxu0 0.0
      %1637 = vmatprep.subr.mxu0 0.0
      %1638 = vmatpush1.msra.mxu0 0.0
      %1639 = vmatprep.subr.mxu0 0.0
      %1640 = vmatpush1.msra.mxu0 0.0
      %1641 = vmatprep.subr.mxu0 0.0
      %1642 = vmatpush1.msra.mxu0 0.0
      %1643 = vmatprep.subr.mxu0 0.0
      %1644 = vmatpush1.msra.mxu0 0.0
      %1645 = vmatprep.subr.mxu0 0.0
      %1646 = vmatpush1.msra.mxu0 0.0
      %1647 = vmatprep.subr.mxu0 0.0
      %1648 = vmatpush1.msra.mxu0 0.0
      %1649 = vmatprep.subr.mxu0 0.0
      %1650 = vmatpush1.msra.mxu0 0.0
      %1651 = vmatprep.subr.mxu0 0.0
      %1652 = vmatpush1.msra.mxu0 0.0
      %1653 = vmatprep.subr.mxu0 0.0
      %1654 = vmatpush1.msra.mxu0 0.0
      %1655 = vmatprep.subr.mxu0 0.0
      %1656 = vmatpush1.msra.mxu0 0.0
      %1657 = vmatprep.subr.mxu0 0.0
      %1658 = vmatpush1.msra.mxu0 0.0
      %1659 = vmatprep.subr.mxu0 0.0
      %1660 = vmatpush1.msra.mxu0 0.0
      %1661 = vmatprep.subr.mxu0 0.0
      %1662 = vmatpush1.msra.mxu0 0.0
      %1663 = vmatprep.subr.mxu0 0.0
      %1664 = vmatpush1.msra.mxu0 0.0
      %1665 = vmatprep.subr.mxu0 0.0
      %1666 = vmatpush1.msra.mxu0 0.0
      %1667 = vmatprep.subr.mxu0 0.0
      %1668 = vmatpush1.msra.mxu0 0.0
      %1669 = vmatprep.subr.mxu0 0.0
      %1670 = vmatpush1.msra.mxu0 0.0
      %1671 = vmatprep.subr.mxu0 0.0
      %1672 = vmatpush1.msra.mxu0 0.0
      %1673 = vmatprep.subr.mxu0 0.0
      %1674 = vmatpush1.msra.mxu0 0.0
      %1675 = vmatprep.mubr.f32.mxu0 0.0
      %1676 = vmatmul.mubr.f32.gmra.mrb[0].mxu0 %v1606
      %v1677 = vpop.f32.mrb[0].mxu0
      %v1678 = vadd.f32 0.0, %v1677
      %v1679 = vpop.f32.mrb[0].mxu0
      %1680 = vmatprep.mubr.f32.mxu0 0.0
      %1681 = vmatmul.mubr.f32.gmra.mrb[0].mxu0 %v1609
      %v1682 = vpop.f32.mrb[0].mxu0
      %v1683 = vadd.f32 0.0, %v1682
      %v1684 = vpop.f32.mrb[0].mxu0
      %1685 = vdwg.mxu0
      %v1686 = vadd.f32 %v1519, %v1522
      %v1687 = vadd.f32 %v1520, %v1523
      %v1689 = vsel %vm497, %v1686, 0
      %v1692 = vsel %vm497, %v1687, 0
      %1694 = vmatprep.subr.mxu0 0.0
      %1695 = vmatpush1.msra.mxu0 %v473
      %1696 = vmatprep.subr.mxu0 0.0
      %1697 = vmatpush1.msra.mxu0 %v474
      %1698 = vmatprep.subr.mxu0 0.0
      %1699 = vmatpush1.msra.mxu0 0.0
      %1700 = vmatprep.subr.mxu0 0.0
      %1701 = vmatpush1.msra.mxu0 0.0
      %1702 = vmatprep.subr.mxu0 0.0
      %1703 = vmatpush1.msra.mxu0 0.0
      %1704 = vmatprep.subr.mxu0 0.0
      %1705 = vmatpush1.msra.mxu0 0.0
      %1706 = vmatprep.subr.mxu0 0.0
      %1707 = vmatpush1.msra.mxu0 0.0
      %1708 = vmatprep.subr.mxu0 0.0
      %1709 = vmatpush1.msra.mxu0 0.0
      %1710 = vmatprep.subr.mxu0 0.0
      %1711 = vmatpush1.msra.mxu0 0.0
      %1712 = vmatprep.subr.mxu0 0.0
      %1713 = vmatpush1.msra.mxu0 0.0
      %1714 = vmatprep.subr.mxu0 0.0
      %1715 = vmatpush1.msra.mxu0 0.0
      %1716 = vmatprep.subr.mxu0 0.0
      %1717 = vmatpush1.msra.mxu0 0.0
      %1718 = vmatprep.subr.mxu0 0.0
      %1719 = vmatpush1.msra.mxu0 0.0
      %1720 = vmatprep.subr.mxu0 0.0
      %1721 = vmatpush1.msra.mxu0 0.0
      %1722 = vmatprep.subr.mxu0 0.0
      %1723 = vmatpush1.msra.mxu0 0.0
      %1724 = vmatprep.subr.mxu0 0.0
      %1725 = vmatpush1.msra.mxu0 0.0
      %1726 = vmatprep.subr.mxu0 0.0
      %1727 = vmatpush1.msra.mxu0 0.0
      %1728 = vmatprep.subr.mxu0 0.0
      %1729 = vmatpush1.msra.mxu0 0.0
      %1730 = vmatprep.subr.mxu0 0.0
      %1731 = vmatpush1.msra.mxu0 0.0
      %1732 = vmatprep.subr.mxu0 0.0
      %1733 = vmatpush1.msra.mxu0 0.0
      %1734 = vmatprep.subr.mxu0 0.0
      %1735 = vmatpush1.msra.mxu0 0.0
      %1736 = vmatprep.subr.mxu0 0.0
      %1737 = vmatpush1.msra.mxu0 0.0
      %1738 = vmatprep.subr.mxu0 0.0
      %1739 = vmatpush1.msra.mxu0 0.0
      %1740 = vmatprep.subr.mxu0 0.0
      %1741 = vmatpush1.msra.mxu0 0.0
      %1742 = vmatprep.subr.mxu0 0.0
      %1743 = vmatpush1.msra.mxu0 0.0
      %1744 = vmatprep.subr.mxu0 0.0
      %1745 = vmatpush1.msra.mxu0 0.0
      %1746 = vmatprep.subr.mxu0 0.0
      %1747 = vmatpush1.msra.mxu0 0.0
      %1748 = vmatprep.subr.mxu0 0.0
      %1749 = vmatpush1.msra.mxu0 0.0
      %1750 = vmatprep.subr.mxu0 0.0
      %1751 = vmatpush1.msra.mxu0 0.0
      %1752 = vmatprep.subr.mxu0 0.0
      %1753 = vmatpush1.msra.mxu0 0.0
      %1754 = vmatprep.subr.mxu0 0.0
      %1755 = vmatpush1.msra.mxu0 0.0
      %1756 = vmatprep.subr.mxu0 0.0
      %1757 = vmatpush1.msra.mxu0 0.0
      %1758 = vmatprep.mubr.f32.mxu0 0.0
      %1759 = vmatmul.mubr.f32.gmra.mrb[0].mxu0 %v1689
      %v1760 = vpop.f32.mrb[0].mxu0
      %v1761 = vadd.f32 0.0, %v1760
      %v1762 = vpop.f32.mrb[0].mxu0
      %1763 = vmatprep.mubr.f32.mxu0 0.0
      %1764 = vmatmul.mubr.f32.gmra.mrb[0].mxu0 %v1692
      %v1765 = vpop.f32.mrb[0].mxu0
      %v1766 = vadd.f32 0.0, %v1765
      %v1767 = vpop.f32.mrb[0].mxu0
      %1768 = vdwg.mxu0
      %v1769 = vsub.f32 %v1597, %v1678
      %v1770 = vsub.f32 %v1602, %v1683
      %v1771 = vsub.f32 %v1761, %v1597
      %v1772 = vsub.f32 %v1766, %v1602
      %v1773 = vsub.f32 %v1771, %v1678
      %v1774 = vsub.f32 %v1772, %v1683
      %1775 = vmatprep.subr.mxu0 0.0
      %1776 = vmatpush1.msra.mxu0 %v1769
      %1777 = vmatprep.subr.mxu0 0.0
      %1778 = vmatpush1.msra.mxu0 %v1770
      %1779 = vmatprep.subr.mxu0 0.0
      %1780 = vmatpush1.msra.mxu0 0.0
      %1781 = vmatprep.subr.mxu0 0.0
      %1782 = vmatpush1.msra.mxu0 0.0
      %1783 = vmatprep.subr.mxu0 0.0
      %1784 = vmatpush1.msra.mxu0 0.0
      %1785 = vmatprep.subr.mxu0 0.0
      %1786 = vmatpush1.msra.mxu0 0.0
      %1787 = vmatprep.subr.mxu0 0.0
      %1788 = vmatpush1.msra.mxu0 0.0
      %1789 = vmatprep.subr.mxu0 0.0
      %1790 = vmatpush1.msra.mxu0 0.0
      %1791 = vmatprep.subr.mxu0 0.0
      %1792 = vmatpush1.msra.mxu0 0.0
      %1793 = vmatprep.subr.mxu0 0.0
      %1794 = vmatpush1.msra.mxu0 0.0
      %1795 = vmatprep.subr.mxu0 0.0
      %1796 = vmatpush1.msra.mxu0 0.0
      %1797 = vmatprep.subr.mxu0 0.0
      %1798 = vmatpush1.msra.mxu0 0.0
      %1799 = vmatprep.subr.mxu0 0.0
      %1800 = vmatpush1.msra.mxu0 0.0
      %1801 = vmatprep.subr.mxu0 0.0
      %1802 = vmatpush1.msra.mxu0 0.0
      %1803 = vmatprep.subr.mxu0 0.0
      %1804 = vmatpush1.msra.mxu0 0.0
      %1805 = vmatprep.subr.mxu0 0.0
      %1806 = vmatpush1.msra.mxu0 0.0
      %1807 = vmatprep.subr.mxu0 0.0
      %1808 = vmatpush1.msra.mxu0 0.0
      %1809 = vmatprep.subr.mxu0 0.0
      %1810 = vmatpush1.msra.mxu0 0.0
      %1811 = vmatprep.subr.mxu0 0.0
      %1812 = vmatpush1.msra.mxu0 0.0
      %1813 = vmatprep.subr.mxu0 0.0
      %1814 = vmatpush1.msra.mxu0 0.0
      %1815 = vmatprep.subr.mxu0 0.0
      %1816 = vmatpush1.msra.mxu0 0.0
      %1817 = vmatprep.subr.mxu0 0.0
      %1818 = vmatpush1.msra.mxu0 0.0
      %1819 = vmatprep.subr.mxu0 0.0
      %1820 = vmatpush1.msra.mxu0 0.0
      %1821 = vmatprep.subr.mxu0 0.0
      %1822 = vmatpush1.msra.mxu0 0.0
      %1823 = vmatprep.subr.mxu0 0.0
      %1824 = vmatpush1.msra.mxu0 0.0
      %1825 = vmatprep.subr.mxu0 0.0
      %1826 = vmatpush1.msra.mxu0 0.0
      %1827 = vmatprep.subr.mxu0 0.0
      %1828 = vmatpush1.msra.mxu0 0.0
      %1829 = vmatprep.subr.mxu0 0.0
      %1830 = vmatpush1.msra.mxu0 0.0
      %1831 = vmatprep.subr.mxu0 0.0
      %1832 = vmatpush1.msra.mxu0 0.0
      %1833 = vmatprep.subr.mxu0 0.0
      %1834 = vmatpush1.msra.mxu0 0.0
      %1835 = vmatprep.subr.mxu0 0.0
      %1836 = vmatpush1.msra.mxu0 0.0
      %1837 = vmatprep.subr.mxu0 0.0
      %1838 = vmatpush1.msra.mxu0 0.0
      %1839 = vmatprep.mubr.f32.mxu0 0.0
      %1840 = vmatmul.mubr.f32.gmra.mrb[0].mxu0 %v750
      %v1841 = vpop.f32.mrb[0].mxu0
      %v1842 = vadd.f32 0.0, %v1841
      %v1843 = vpop.f32.mrb[0].mxu0
      %1844 = vmatprep.mubr.f32.mxu0 0.0
      %1845 = vmatmul.mubr.f32.gmra.mrb[0].mxu0 %v753
      %v1846 = vpop.f32.mrb[0].mxu0
      %v1847 = vadd.f32 0.0, %v1846
      %v1848 = vpop.f32.mrb[0].mxu0
      %1849 = vdwg.mxu0
      %1850 = vmatprep.subr.mxu0 0.0
      %1851 = vmatpush1.msra.mxu0 %v1773
      %1852 = vmatprep.subr.mxu0 0.0
      %1853 = vmatpush1.msra.mxu0 %v1774
      %1854 = vmatprep.subr.mxu0 0.0
      %1855 = vmatpush1.msra.mxu0 0.0
      %1856 = vmatprep.subr.mxu0 0.0
      %1857 = vmatpush1.msra.mxu0 0.0
      %1858 = vmatprep.subr.mxu0 0.0
      %1859 = vmatpush1.msra.mxu0 0.0
      %1860 = vmatprep.subr.mxu0 0.0
      %1861 = vmatpush1.msra.mxu0 0.0
      %1862 = vmatprep.subr.mxu0 0.0
      %1863 = vmatpush1.msra.mxu0 0.0
      %1864 = vmatprep.subr.mxu0 0.0
      %1865 = vmatpush1.msra.mxu0 0.0
      %1866 = vmatprep.subr.mxu0 0.0
      %1867 = vmatpush1.msra.mxu0 0.0
      %1868 = vmatprep.subr.mxu0 0.0
      %1869 = vmatpush1.msra.mxu0 0.0
      %1870 = vmatprep.subr.mxu0 0.0
      %1871 = vmatpush1.msra.mxu0 0.0
      %1872 = vmatprep.subr.mxu0 0.0
      %1873 = vmatpush1.msra.mxu0 0.0
      %1874 = vmatprep.subr.mxu0 0.0
      %1875 = vmatpush1.msra.mxu0 0.0
      %1876 = vmatprep.subr.mxu0 0.0
      %1877 = vmatpush1.msra.mxu0 0.0
      %1878 = vmatprep.subr.mxu0 0.0
      %1879 = vmatpush1.msra.mxu0 0.0
      %1880 = vmatprep.subr.mxu0 0.0
      %1881 = vmatpush1.msra.mxu0 0.0
      %1882 = vmatprep.subr.mxu0 0.0
      %1883 = vmatpush1.msra.mxu0 0.0
      %1884 = vmatprep.subr.mxu0 0.0
      %1885 = vmatpush1.msra.mxu0 0.0
      %1886 = vmatprep.subr.mxu0 0.0
      %1887 = vmatpush1.msra.mxu0 0.0
      %1888 = vmatprep.subr.mxu0 0.0
      %1889 = vmatpush1.msra.mxu0 0.0
      %1890 = vmatprep.subr.mxu0 0.0
      %1891 = vmatpush1.msra.mxu0 0.0
      %1892 = vmatprep.subr.mxu0 0.0
      %1893 = vmatpush1.msra.mxu0 0.0
      %1894 = vmatprep.subr.mxu0 0.0
      %1895 = vmatpush1.msra.mxu0 0.0
      %1896 = vmatprep.subr.mxu0 0.0
      %1897 = vmatpush1.msra.mxu0 0.0
      %1898 = vmatprep.subr.mxu0 0.0
      %1899 = vmatpush1.msra.mxu0 0.0
      %1900 = vmatprep.subr.mxu0 0.0
      %1901 = vmatpush1.msra.mxu0 0.0
      %1902 = vmatprep.subr.mxu0 0.0
      %1903 = vmatpush1.msra.mxu0 0.0
      %1904 = vmatprep.subr.mxu0 0.0
      %1905 = vmatpush1.msra.mxu0 0.0
      %1906 = vmatprep.subr.mxu0 0.0
      %1907 = vmatpush1.msra.mxu0 0.0
      %1908 = vmatprep.subr.mxu0 0.0
      %1909 = vmatpush1.msra.mxu0 0.0
      %1910 = vmatprep.subr.mxu0 0.0
      %1911 = vmatpush1.msra.mxu0 0.0
      %1912 = vmatprep.subr.mxu0 0.0
      %1913 = vmatpush1.msra.mxu0 0.0
      %1914 = vmatprep.mubr.f32.mxu0 0.0
      %1915 = vmatmul.mubr.f32.gmra.mrb[0].mxu0 %v831
      %v1916 = vpop.f32.mrb[0].mxu0
      %v1917 = vadd.f32 0.0, %v1916
      %v1918 = vpop.f32.mrb[0].mxu0
      %1919 = vmatprep.mubr.f32.mxu0 0.0
      %1920 = vmatmul.mubr.f32.gmra.mrb[0].mxu0 %v834
      %v1921 = vpop.f32.mrb[0].mxu0
      %v1922 = vadd.f32 0.0, %v1921
      %v1923 = vpop.f32.mrb[0].mxu0
      %1924 = vdwg.mxu0
      %v1925 = vadd.f32 %v1769, %v1773
      %v1926 = vadd.f32 %v1770, %v1774
      %1927 = vmatprep.subr.mxu0 0.0
      %1928 = vmatpush1.msra.mxu0 %v1925
      %1929 = vmatprep.subr.mxu0 0.0
      %1930 = vmatpush1.msra.mxu0 %v1926
      %1931 = vmatprep.subr.mxu0 0.0
      %1932 = vmatpush1.msra.mxu0 0.0
      %1933 = vmatprep.subr.mxu0 0.0
      %1934 = vmatpush1.msra.mxu0 0.0
      %1935 = vmatprep.subr.mxu0 0.0
      %1936 = vmatpush1.msra.mxu0 0.0
      %1937 = vmatprep.subr.mxu0 0.0
      %1938 = vmatpush1.msra.mxu0 0.0
      %1939 = vmatprep.subr.mxu0 0.0
      %1940 = vmatpush1.msra.mxu0 0.0
      %1941 = vmatprep.subr.mxu0 0.0
      %1942 = vmatpush1.msra.mxu0 0.0
      %1943 = vmatprep.subr.mxu0 0.0
      %1944 = vmatpush1.msra.mxu0 0.0
      %1945 = vmatprep.subr.mxu0 0.0
      %1946 = vmatpush1.msra.mxu0 0.0
      %1947 = vmatprep.subr.mxu0 0.0
      %1948 = vmatpush1.msra.mxu0 0.0
      %1949 = vmatprep.subr.mxu0 0.0
      %1950 = vmatpush1.msra.mxu0 0.0
      %1951 = vmatprep.subr.mxu0 0.0
      %1952 = vmatpush1.msra.mxu0 0.0
      %1953 = vmatprep.subr.mxu0 0.0
      %1954 = vmatpush1.msra.mxu0 0.0
      %1955 = vmatprep.subr.mxu0 0.0
      %1956 = vmatpush1.msra.mxu0 0.0
      %1957 = vmatprep.subr.mxu0 0.0
      %1958 = vmatpush1.msra.mxu0 0.0
      %1959 = vmatprep.subr.mxu0 0.0
      %1960 = vmatpush1.msra.mxu0 0.0
      %1961 = vmatprep.subr.mxu0 0.0
      %1962 = vmatpush1.msra.mxu0 0.0
      %1963 = vmatprep.subr.mxu0 0.0
      %1964 = vmatpush1.msra.mxu0 0.0
      %1965 = vmatprep.subr.mxu0 0.0
      %1966 = vmatpush1.msra.mxu0 0.0
      %1967 = vmatprep.subr.mxu0 0.0
      %1968 = vmatpush1.msra.mxu0 0.0
      %1969 = vmatprep.subr.mxu0 0.0
      %1970 = vmatpush1.msra.mxu0 0.0
      %1971 = vmatprep.subr.mxu0 0.0
      %1972 = vmatpush1.msra.mxu0 0.0
      %1973 = vmatprep.subr.mxu0 0.0
      %1974 = vmatpush1.msra.mxu0 0.0
      %1975 = vmatprep.subr.mxu0 0.0
      %1976 = vmatpush1.msra.mxu0 0.0
      %1977 = vmatprep.subr.mxu0 0.0
      %1978 = vmatpush1.msra.mxu0 0.0
      %1979 = vmatprep.subr.mxu0 0.0
      %1980 = vmatpush1.msra.mxu0 0.0
      %1981 = vmatprep.subr.mxu0 0.0
      %1982 = vmatpush1.msra.mxu0 0.0
      %1983 = vmatprep.subr.mxu0 0.0
      %1984 = vmatpush1.msra.mxu0 0.0
      %1985 = vmatprep.subr.mxu0 0.0
      %1986 = vmatpush1.msra.mxu0 0.0
      %1987 = vmatprep.subr.mxu0 0.0
      %1988 = vmatpush1.msra.mxu0 0.0
      %1989 = vmatprep.subr.mxu0 0.0
      %1990 = vmatpush1.msra.mxu0 0.0
      %1991 = vmatprep.mubr.f32.mxu0 0.0
      %1992 = vmatmul.mubr.f32.gmra.mrb[0].mxu0 %v914
      %v1993 = vpop.f32.mrb[0].mxu0
      %v1994 = vadd.f32 0.0, %v1993
      %v1995 = vpop.f32.mrb[0].mxu0
      %1996 = vmatprep.mubr.f32.mxu0 0.0
      %1997 = vmatmul.mubr.f32.gmra.mrb[0].mxu0 %v917
      %v1998 = vpop.f32.mrb[0].mxu0
      %v1999 = vadd.f32 0.0, %v1998
      %v2000 = vpop.f32.mrb[0].mxu0
      %2001 = vdwg.mxu0
      %v2002 = vsub.f32 %v1842, %v1917
      %v2003 = vsub.f32 %v1847, %v1922
      %v2004 = vsub.f32 %v1994, %v1842
      %v2005 = vsub.f32 %v1999, %v1847
      %v2006 = vsub.f32 %v2004, %v1917
      %v2007 = vsub.f32 %v2005, %v1922
      %s2008 = scalar_lea.vmem %s436, 16
      %v2009 = vld [vmem:[%s2008] sm:$0xff]
      %v2010 = vld [vmem:[%s2008 + $0x8] sm:$0xff]
      %v2011 = vadd.f32 %v2009, %v2002
      %v2012 = vadd.f32 %v2010, %v2003
      %v2013 = vmul.f32 %v2011, %v491
      %v2014 = vmul.f32 %v2012, %v492
      %s2015 = scalar_lea.vmem %s443, 16
      %v2016 = vld [vmem:[%s2015] sm:$0xff]
      %v2017 = vld [vmem:[%s2015 + $0x8] sm:$0xff]
      %v2018 = vadd.f32 %v2016, %v2006
      %v2019 = vadd.f32 %v2017, %v2007
      %v2020 = vmul.f32 %v2018, %v491
      %v2021 = vmul.f32 %v2019, %v492
      %v2023 = vsel %vm497, %v2013, 0
      %v2026 = vsel %vm497, %v2014, 0
      %2028 = vmatprep.subr.mxu0 0.0
      %2029 = vmatpush1.msra.mxu0 %v483
      %2030 = vmatprep.subr.mxu0 0.0
      %2031 = vmatpush1.msra.mxu0 %v484
      %2032 = vmatprep.subr.mxu0 0.0
      %2033 = vmatpush1.msra.mxu0 0.0
      %2034 = vmatprep.subr.mxu0 0.0
      %2035 = vmatpush1.msra.mxu0 0.0
      %2036 = vmatprep.subr.mxu0 0.0
      %2037 = vmatpush1.msra.mxu0 0.0
      %2038 = vmatprep.subr.mxu0 0.0
      %2039 = vmatpush1.msra.mxu0 0.0
      %2040 = vmatprep.subr.mxu0 0.0
      %2041 = vmatpush1.msra.mxu0 0.0
      %2042 = vmatprep.subr.mxu0 0.0
      %2043 = vmatpush1.msra.mxu0 0.0
      %2044 = vmatprep.subr.mxu0 0.0
      %2045 = vmatpush1.msra.mxu0 0.0
      %2046 = vmatprep.subr.mxu0 0.0
      %2047 = vmatpush1.msra.mxu0 0.0
      %2048 = vmatprep.subr.mxu0 0.0
      %2049 = vmatpush1.msra.mxu0 0.0
      %2050 = vmatprep.subr.mxu0 0.0
      %2051 = vmatpush1.msra.mxu0 0.0
      %2052 = vmatprep.subr.mxu0 0.0
      %2053 = vmatpush1.msra.mxu0 0.0
      %2054 = vmatprep.subr.mxu0 0.0
      %2055 = vmatpush1.msra.mxu0 0.0
      %2056 = vmatprep.subr.mxu0 0.0
      %2057 = vmatpush1.msra.mxu0 0.0
      %2058 = vmatprep.subr.mxu0 0.0
      %2059 = vmatpush1.msra.mxu0 0.0
      %2060 = vmatprep.subr.mxu0 0.0
      %2061 = vmatpush1.msra.mxu0 0.0
      %2062 = vmatprep.subr.mxu0 0.0
      %2063 = vmatpush1.msra.mxu0 0.0
      %2064 = vmatprep.subr.mxu0 0.0
      %2065 = vmatpush1.msra.mxu0 0.0
      %2066 = vmatprep.subr.mxu0 0.0
      %2067 = vmatpush1.msra.mxu0 0.0
      %2068 = vmatprep.subr.mxu0 0.0
      %2069 = vmatpush1.msra.mxu0 0.0
      %2070 = vmatprep.subr.mxu0 0.0
      %2071 = vmatpush1.msra.mxu0 0.0
      %2072 = vmatprep.subr.mxu0 0.0
      %2073 = vmatpush1.msra.mxu0 0.0
      %2074 = vmatprep.subr.mxu0 0.0
      %2075 = vmatpush1.msra.mxu0 0.0
      %2076 = vmatprep.subr.mxu0 0.0
      %2077 = vmatpush1.msra.mxu0 0.0
      %2078 = vmatprep.subr.mxu0 0.0
      %2079 = vmatpush1.msra.mxu0 0.0
      %2080 = vmatprep.subr.mxu0 0.0
      %2081 = vmatpush1.msra.mxu0 0.0
      %2082 = vmatprep.subr.mxu0 0.0
      %2083 = vmatpush1.msra.mxu0 0.0
      %2084 = vmatprep.subr.mxu0 0.0
      %2085 = vmatpush1.msra.mxu0 0.0
      %2086 = vmatprep.subr.mxu0 0.0
      %2087 = vmatpush1.msra.mxu0 0.0
      %2088 = vmatprep.subr.mxu0 0.0
      %2089 = vmatpush1.msra.mxu0 0.0
      %2090 = vmatprep.subr.mxu0 0.0
      %2091 = vmatpush1.msra.mxu0 0.0
      %2092 = vmatprep.mubr.f32.mxu0 0.0
      %2093 = vmatmul.mubr.f32.gmra.mrb[0].mxu0 %v2023
      %v2094 = vpop.f32.mrb[0].mxu0
      %v2095 = vadd.f32 0.0, %v2094
      %v2096 = vpop.f32.mrb[0].mxu0
      %2097 = vmatprep.mubr.f32.mxu0 0.0
      %2098 = vmatmul.mubr.f32.gmra.mrb[0].mxu0 %v2026
      %v2099 = vpop.f32.mrb[0].mxu0
      %v2100 = vadd.f32 0.0, %v2099
      %v2101 = vpop.f32.mrb[0].mxu0
      %2102 = vdwg.mxu0
      %v2104 = vsel %vm497, %v2020, 0
      %v2107 = vsel %vm497, %v2021, 0
      %2109 = vmatprep.subr.mxu0 0.0
      %2110 = vmatpush1.msra.mxu0 %v486
      %2111 = vmatprep.subr.mxu0 0.0
      %2112 = vmatpush1.msra.mxu0 %v487
      %2113 = vmatprep.subr.mxu0 0.0
      %2114 = vmatpush1.msra.mxu0 0.0
      %2115 = vmatprep.subr.mxu0 0.0
      %2116 = vmatpush1.msra.mxu0 0.0
      %2117 = vmatprep.subr.mxu0 0.0
      %2118 = vmatpush1.msra.mxu0 0.0
      %2119 = vmatprep.subr.mxu0 0.0
      %2120 = vmatpush1.msra.mxu0 0.0
      %2121 = vmatprep.subr.mxu0 0.0
      %2122 = vmatpush1.msra.mxu0 0.0
      %2123 = vmatprep.subr.mxu0 0.0
      %2124 = vmatpush1.msra.mxu0 0.0
      %2125 = vmatprep.subr.mxu0 0.0
      %2126 = vmatpush1.msra.mxu0 0.0
      %2127 = vmatprep.subr.mxu0 0.0
      %2128 = vmatpush1.msra.mxu0 0.0
      %2129 = vmatprep.subr.mxu0 0.0
      %2130 = vmatpush1.msra.mxu0 0.0
      %2131 = vmatprep.subr.mxu0 0.0
      %2132 = vmatpush1.msra.mxu0 0.0
      %2133 = vmatprep.subr.mxu0 0.0
      %2134 = vmatpush1.msra.mxu0 0.0
      %2135 = vmatprep.subr.mxu0 0.0
      %2136 = vmatpush1.msra.mxu0 0.0
      %2137 = vmatprep.subr.mxu0 0.0
      %2138 = vmatpush1.msra.mxu0 0.0
      %2139 = vmatprep.subr.mxu0 0.0
      %2140 = vmatpush1.msra.mxu0 0.0
      %2141 = vmatprep.subr.mxu0 0.0
      %2142 = vmatpush1.msra.mxu0 0.0
      %2143 = vmatprep.subr.mxu0 0.0
      %2144 = vmatpush1.msra.mxu0 0.0
      %2145 = vmatprep.subr.mxu0 0.0
      %2146 = vmatpush1.msra.mxu0 0.0
      %2147 = vmatprep.subr.mxu0 0.0
      %2148 = vmatpush1.msra.mxu0 0.0
      %2149 = vmatprep.subr.mxu0 0.0
      %2150 = vmatpush1.msra.mxu0 0.0
      %2151 = vmatprep.subr.mxu0 0.0
      %2152 = vmatpush1.msra.mxu0 0.0
      %2153 = vmatprep.subr.mxu0 0.0
      %2154 = vmatpush1.msra.mxu0 0.0
      %2155 = vmatprep.subr.mxu0 0.0
      %2156 = vmatpush1.msra.mxu0 0.0
      %2157 = vmatprep.subr.mxu0 0.0
      %2158 = vmatpush1.msra.mxu0 0.0
      %2159 = vmatprep.subr.mxu0 0.0
      %2160 = vmatpush1.msra.mxu0 0.0
      %2161 = vmatprep.subr.mxu0 0.0
      %2162 = vmatpush1.msra.mxu0 0.0
      %2163 = vmatprep.subr.mxu0 0.0
      %2164 = vmatpush1.msra.mxu0 0.0
      %2165 = vmatprep.subr.mxu0 0.0
      %2166 = vmatpush1.msra.mxu0 0.0
      %2167 = vmatprep.subr.mxu0 0.0
      %2168 = vmatpush1.msra.mxu0 0.0
      %2169 = vmatprep.subr.mxu0 0.0
      %2170 = vmatpush1.msra.mxu0 0.0
      %2171 = vmatprep.subr.mxu0 0.0
      %2172 = vmatpush1.msra.mxu0 0.0
      %2173 = vmatprep.mubr.f32.mxu0 0.0
      %2174 = vmatmul.mubr.f32.gmra.mrb[0].mxu0 %v2104
      %v2175 = vpop.f32.mrb[0].mxu0
      %v2176 = vadd.f32 0.0, %v2175
      %v2177 = vpop.f32.mrb[0].mxu0
      %2178 = vmatprep.mubr.f32.mxu0 0.0
      %2179 = vmatmul.mubr.f32.gmra.mrb[0].mxu0 %v2107
      %v2180 = vpop.f32.mrb[0].mxu0
      %v2181 = vadd.f32 0.0, %v2180
      %v2182 = vpop.f32.mrb[0].mxu0
      %2183 = vdwg.mxu0
      %v2184 = vadd.f32 %v2013, %v2020
      %v2185 = vadd.f32 %v2014, %v2021
      %v2187 = vsel %vm497, %v2184, 0
      %v2190 = vsel %vm497, %v2185, 0
      %2192 = vmatprep.subr.mxu0 0.0
      %2193 = vmatpush1.msra.mxu0 %v489
      %2194 = vmatprep.subr.mxu0 0.0
      %2195 = vmatpush1.msra.mxu0 %v490
      %2196 = vmatprep.subr.mxu0 0.0
      %2197 = vmatpush1.msra.mxu0 0.0
      %2198 = vmatprep.subr.mxu0 0.0
      %2199 = vmatpush1.msra.mxu0 0.0
      %2200 = vmatprep.subr.mxu0 0.0
      %2201 = vmatpush1.msra.mxu0 0.0
      %2202 = vmatprep.subr.mxu0 0.0
      %2203 = vmatpush1.msra.mxu0 0.0
      %2204 = vmatprep.subr.mxu0 0.0
      %2205 = vmatpush1.msra.mxu0 0.0
      %2206 = vmatprep.subr.mxu0 0.0
      %2207 = vmatpush1.msra.mxu0 0.0
      %2208 = vmatprep.subr.mxu0 0.0
      %2209 = vmatpush1.msra.mxu0 0.0
      %2210 = vmatprep.subr.mxu0 0.0
      %2211 = vmatpush1.msra.mxu0 0.0
      %2212 = vmatprep.subr.mxu0 0.0
      %2213 = vmatpush1.msra.mxu0 0.0
      %2214 = vmatprep.subr.mxu0 0.0
      %2215 = vmatpush1.msra.mxu0 0.0
      %2216 = vmatprep.subr.mxu0 0.0
      %2217 = vmatpush1.msra.mxu0 0.0
      %2218 = vmatprep.subr.mxu0 0.0
      %2219 = vmatpush1.msra.mxu0 0.0
      %2220 = vmatprep.subr.mxu0 0.0
      %2221 = vmatpush1.msra.mxu0 0.0
      %2222 = vmatprep.subr.mxu0 0.0
      %2223 = vmatpush1.msra.mxu0 0.0
      %2224 = vmatprep.subr.mxu0 0.0
      %2225 = vmatpush1.msra.mxu0 0.0
      %2226 = vmatprep.subr.mxu0 0.0
      %2227 = vmatpush1.msra.mxu0 0.0
      %2228 = vmatprep.subr.mxu0 0.0
      %2229 = vmatpush1.msra.mxu0 0.0
      %2230 = vmatprep.subr.mxu0 0.0
      %2231 = vmatpush1.msra.mxu0 0.0
      %2232 = vmatprep.subr.mxu0 0.0
      %2233 = vmatpush1.msra.mxu0 0.0
      %2234 = vmatprep.subr.mxu0 0.0
      %2235 = vmatpush1.msra.mxu0 0.0
      %2236 = vmatprep.subr.mxu0 0.0
      %2237 = vmatpush1.msra.mxu0 0.0
      %2238 = vmatprep.subr.mxu0 0.0
      %2239 = vmatpush1.msra.mxu0 0.0
      %2240 = vmatprep.subr.mxu0 0.0
      %2241 = vmatpush1.msra.mxu0 0.0
      %2242 = vmatprep.subr.mxu0 0.0
      %2243 = vmatpush1.msra.mxu0 0.0
      %2244 = vmatprep.subr.mxu0 0.0
      %2245 = vmatpush1.msra.mxu0 0.0
      %2246 = vmatprep.subr.mxu0 0.0
      %2247 = vmatpush1.msra.mxu0 0.0
      %2248 = vmatprep.subr.mxu0 0.0
      %2249 = vmatpush1.msra.mxu0 0.0
      %2250 = vmatprep.subr.mxu0 0.0
      %2251 = vmatpush1.msra.mxu0 0.0
      %2252 = vmatprep.subr.mxu0 0.0
      %2253 = vmatpush1.msra.mxu0 0.0
      %2254 = vmatprep.subr.mxu0 0.0
      %2255 = vmatpush1.msra.mxu0 0.0
      %2256 = vmatprep.mubr.f32.mxu0 0.0
      %2257 = vmatmul.mubr.f32.gmra.mrb[0].mxu0 %v2187
      %v2258 = vpop.f32.mrb[0].mxu0
      %v2259 = vadd.f32 0.0, %v2258
      %v2260 = vpop.f32.mrb[0].mxu0
      %2261 = vmatprep.mubr.f32.mxu0 0.0
      %2262 = vmatmul.mubr.f32.gmra.mrb[0].mxu0 %v2190
      %v2263 = vpop.f32.mrb[0].mxu0
      %v2264 = vadd.f32 0.0, %v2263
      %v2265 = vpop.f32.mrb[0].mxu0
      %2266 = vdwg.mxu0
      %v2267 = vsub.f32 %v2095, %v2176
      %v2268 = vsub.f32 %v2100, %v2181
      %v2269 = vsub.f32 %v2259, %v2095
      %v2270 = vsub.f32 %v2264, %v2100
      %v2271 = vsub.f32 %v2269, %v2176
      %v2272 = vsub.f32 %v2270, %v2181
      %2273 = vmatprep.subr.mxu0 0.0
      %2274 = vmatpush1.msra.mxu0 %v2267
      %2275 = vmatprep.subr.mxu0 0.0
      %2276 = vmatpush1.msra.mxu0 %v2268
      %2277 = vmatprep.subr.mxu0 0.0
      %2278 = vmatpush1.msra.mxu0 0.0
      %2279 = vmatprep.subr.mxu0 0.0
      %2280 = vmatpush1.msra.mxu0 0.0
      %2281 = vmatprep.subr.mxu0 0.0
      %2282 = vmatpush1.msra.mxu0 0.0
      %2283 = vmatprep.subr.mxu0 0.0
      %2284 = vmatpush1.msra.mxu0 0.0
      %2285 = vmatprep.subr.mxu0 0.0
      %2286 = vmatpush1.msra.mxu0 0.0
      %2287 = vmatprep.subr.mxu0 0.0
      %2288 = vmatpush1.msra.mxu0 0.0
      %2289 = vmatprep.subr.mxu0 0.0
      %2290 = vmatpush1.msra.mxu0 0.0
      %2291 = vmatprep.subr.mxu0 0.0
      %2292 = vmatpush1.msra.mxu0 0.0
      %2293 = vmatprep.subr.mxu0 0.0
      %2294 = vmatpush1.msra.mxu0 0.0
      %2295 = vmatprep.subr.mxu0 0.0
      %2296 = vmatpush1.msra.mxu0 0.0
      %2297 = vmatprep.subr.mxu0 0.0
      %2298 = vmatpush1.msra.mxu0 0.0
      %2299 = vmatprep.subr.mxu0 0.0
      %2300 = vmatpush1.msra.mxu0 0.0
      %2301 = vmatprep.subr.mxu0 0.0
      %2302 = vmatpush1.msra.mxu0 0.0
      %2303 = vmatprep.subr.mxu0 0.0
      %2304 = vmatpush1.msra.mxu0 0.0
      %2305 = vmatprep.subr.mxu0 0.0
      %2306 = vmatpush1.msra.mxu0 0.0
      %2307 = vmatprep.subr.mxu0 0.0
      %2308 = vmatpush1.msra.mxu0 0.0
      %2309 = vmatprep.subr.mxu0 0.0
      %2310 = vmatpush1.msra.mxu0 0.0
      %2311 = vmatprep.subr.mxu0 0.0
      %2312 = vmatpush1.msra.mxu0 0.0
      %2313 = vmatprep.subr.mxu0 0.0
      %2314 = vmatpush1.msra.mxu0 0.0
      %2315 = vmatprep.subr.mxu0 0.0
      %2316 = vmatpush1.msra.mxu0 0.0
      %2317 = vmatprep.subr.mxu0 0.0
      %2318 = vmatpush1.msra.mxu0 0.0
      %2319 = vmatprep.subr.mxu0 0.0
      %2320 = vmatpush1.msra.mxu0 0.0
      %2321 = vmatprep.subr.mxu0 0.0
      %2322 = vmatpush1.msra.mxu0 0.0
      %2323 = vmatprep.subr.mxu0 0.0
      %2324 = vmatpush1.msra.mxu0 0.0
      %2325 = vmatprep.subr.mxu0 0.0
      %2326 = vmatpush1.msra.mxu0 0.0
      %2327 = vmatprep.subr.mxu0 0.0
      %2328 = vmatpush1.msra.mxu0 0.0
      %2329 = vmatprep.subr.mxu0 0.0
      %2330 = vmatpush1.msra.mxu0 0.0
      %2331 = vmatprep.subr.mxu0 0.0
      %2332 = vmatpush1.msra.mxu0 0.0
      %2333 = vmatprep.subr.mxu0 0.0
      %2334 = vmatpush1.msra.mxu0 0.0
      %2335 = vmatprep.subr.mxu0 0.0
      %2336 = vmatpush1.msra.mxu0 0.0
      %2337 = vmatprep.mubr.f32.mxu0 0.0
      %2338 = vmatmul.mubr.f32.gmra.mrb[0].mxu0 %v1264
      %v2339 = vpop.f32.mrb[0].mxu0
      %v2340 = vadd.f32 0.0, %v2339
      %v2341 = vpop.f32.mrb[0].mxu0
      %2342 = vmatprep.mubr.f32.mxu0 0.0
      %2343 = vmatmul.mubr.f32.gmra.mrb[0].mxu0 %v1267
      %v2344 = vpop.f32.mrb[0].mxu0
      %v2345 = vadd.f32 0.0, %v2344
      %v2346 = vpop.f32.mrb[0].mxu0
      %2347 = vdwg.mxu0
      %2348 = vmatprep.subr.mxu0 0.0
      %2349 = vmatpush1.msra.mxu0 %v2271
      %2350 = vmatprep.subr.mxu0 0.0
      %2351 = vmatpush1.msra.mxu0 %v2272
      %2352 = vmatprep.subr.mxu0 0.0
      %2353 = vmatpush1.msra.mxu0 0.0
      %2354 = vmatprep.subr.mxu0 0.0
      %2355 = vmatpush1.msra.mxu0 0.0
      %2356 = vmatprep.subr.mxu0 0.0
      %2357 = vmatpush1.msra.mxu0 0.0
      %2358 = vmatprep.subr.mxu0 0.0
      %2359 = vmatpush1.msra.mxu0 0.0
      %2360 = vmatprep.subr.mxu0 0.0
      %2361 = vmatpush1.msra.mxu0 0.0
      %2362 = vmatprep.subr.mxu0 0.0
      %2363 = vmatpush1.msra.mxu0 0.0
      %2364 = vmatprep.subr.mxu0 0.0
      %2365 = vmatpush1.msra.mxu0 0.0
      %2366 = vmatprep.subr.mxu0 0.0
      %2367 = vmatpush1.msra.mxu0 0.0
      %2368 = vmatprep.subr.mxu0 0.0
      %2369 = vmatpush1.msra.mxu0 0.0
      %2370 = vmatprep.subr.mxu0 0.0
      %2371 = vmatpush1.msra.mxu0 0.0
      %2372 = vmatprep.subr.mxu0 0.0
      %2373 = vmatpush1.msra.mxu0 0.0
      %2374 = vmatprep.subr.mxu0 0.0
      %2375 = vmatpush1.msra.mxu0 0.0
      %2376 = vmatprep.subr.mxu0 0.0
      %2377 = vmatpush1.msra.mxu0 0.0
      %2378 = vmatprep.subr.mxu0 0.0
      %2379 = vmatpush1.msra.mxu0 0.0
      %2380 = vmatprep.subr.mxu0 0.0
      %2381 = vmatpush1.msra.mxu0 0.0
      %2382 = vmatprep.subr.mxu0 0.0
      %2383 = vmatpush1.msra.mxu0 0.0
      %2384 = vmatprep.subr.mxu0 0.0
      %2385 = vmatpush1.msra.mxu0 0.0
      %2386 = vmatprep.subr.mxu0 0.0
      %2387 = vmatpush1.msra.mxu0 0.0
      %2388 = vmatprep.subr.mxu0 0.0
      %2389 = vmatpush1.msra.mxu0 0.0
      %2390 = vmatprep.subr.mxu0 0.0
      %2391 = vmatpush1.msra.mxu0 0.0
      %2392 = vmatprep.subr.mxu0 0.0
      %2393 = vmatpush1.msra.mxu0 0.0
      %2394 = vmatprep.subr.mxu0 0.0
      %2395 = vmatpush1.msra.mxu0 0.0
      %2396 = vmatprep.subr.mxu0 0.0
      %2397 = vmatpush1.msra.mxu0 0.0
      %2398 = vmatprep.subr.mxu0 0.0
      %2399 = vmatpush1.msra.mxu0 0.0
      %2400 = vmatprep.subr.mxu0 0.0
      %2401 = vmatpush1.msra.mxu0 0.0
      %2402 = vmatprep.subr.mxu0 0.0
      %2403 = vmatpush1.msra.mxu0 0.0
      %2404 = vmatprep.subr.mxu0 0.0
      %2405 = vmatpush1.msra.mxu0 0.0
      %2406 = vmatprep.subr.mxu0 0.0
      %2407 = vmatpush1.msra.mxu0 0.0
      %2408 = vmatprep.subr.mxu0 0.0
      %2409 = vmatpush1.msra.mxu0 0.0
      %2410 = vmatprep.subr.mxu0 0.0
      %2411 = vmatpush1.msra.mxu0 0.0
      %2412 = vmatprep.mubr.f32.mxu0 0.0
      %2413 = vmatmul.mubr.f32.gmra.mrb[0].mxu0 %v1345
      %v2414 = vpop.f32.mrb[0].mxu0
      %v2415 = vadd.f32 0.0, %v2414
      %v2416 = vpop.f32.mrb[0].mxu0
      %2417 = vmatprep.mubr.f32.mxu0 0.0
      %2418 = vmatmul.mubr.f32.gmra.mrb[0].mxu0 %v1348
      %v2419 = vpop.f32.mrb[0].mxu0
      %v2420 = vadd.f32 0.0, %v2419
      %v2421 = vpop.f32.mrb[0].mxu0
      %2422 = vdwg.mxu0
      %v2423 = vadd.f32 %v2267, %v2271
      %v2424 = vadd.f32 %v2268, %v2272
      %2425 = vmatprep.subr.mxu0 0.0
      %2426 = vmatpush1.msra.mxu0 %v2423
      %2427 = vmatprep.subr.mxu0 0.0
      %2428 = vmatpush1.msra.mxu0 %v2424
      %2429 = vmatprep.subr.mxu0 0.0
      %2430 = vmatpush1.msra.mxu0 0.0
      %2431 = vmatprep.subr.mxu0 0.0
      %2432 = vmatpush1.msra.mxu0 0.0
      %2433 = vmatprep.subr.mxu0 0.0
      %2434 = vmatpush1.msra.mxu0 0.0
      %2435 = vmatprep.subr.mxu0 0.0
      %2436 = vmatpush1.msra.mxu0 0.0
      %2437 = vmatprep.subr.mxu0 0.0
      %2438 = vmatpush1.msra.mxu0 0.0
      %2439 = vmatprep.subr.mxu0 0.0
      %2440 = vmatpush1.msra.mxu0 0.0
      %2441 = vmatprep.subr.mxu0 0.0
      %2442 = vmatpush1.msra.mxu0 0.0
      %2443 = vmatprep.subr.mxu0 0.0
      %2444 = vmatpush1.msra.mxu0 0.0
      %2445 = vmatprep.subr.mxu0 0.0
      %2446 = vmatpush1.msra.mxu0 0.0
      %2447 = vmatprep.subr.mxu0 0.0
      %2448 = vmatpush1.msra.mxu0 0.0
      %2449 = vmatprep.subr.mxu0 0.0
      %2450 = vmatpush1.msra.mxu0 0.0
      %2451 = vmatprep.subr.mxu0 0.0
      %2452 = vmatpush1.msra.mxu0 0.0
      %2453 = vmatprep.subr.mxu0 0.0
      %2454 = vmatpush1.msra.mxu0 0.0
      %2455 = vmatprep.subr.mxu0 0.0
      %2456 = vmatpush1.msra.mxu0 0.0
      %2457 = vmatprep.subr.mxu0 0.0
      %2458 = vmatpush1.msra.mxu0 0.0
      %2459 = vmatprep.subr.mxu0 0.0
      %2460 = vmatpush1.msra.mxu0 0.0
      %2461 = vmatprep.subr.mxu0 0.0
      %2462 = vmatpush1.msra.mxu0 0.0
      %2463 = vmatprep.subr.mxu0 0.0
      %2464 = vmatpush1.msra.mxu0 0.0
      %2465 = vmatprep.subr.mxu0 0.0
      %2466 = vmatpush1.msra.mxu0 0.0
      %2467 = vmatprep.subr.mxu0 0.0
      %2468 = vmatpush1.msra.mxu0 0.0
      %2469 = vmatprep.subr.mxu0 0.0
      %2470 = vmatpush1.msra.mxu0 0.0
      %2471 = vmatprep.subr.mxu0 0.0
      %2472 = vmatpush1.msra.mxu0 0.0
      %2473 = vmatprep.subr.mxu0 0.0
      %2474 = vmatpush1.msra.mxu0 0.0
      %2475 = vmatprep.subr.mxu0 0.0
      %2476 = vmatpush1.msra.mxu0 0.0
      %2477 = vmatprep.subr.mxu0 0.0
      %2478 = vmatpush1.msra.mxu0 0.0
      %2479 = vmatprep.subr.mxu0 0.0
      %2480 = vmatpush1.msra.mxu0 0.0
      %2481 = vmatprep.subr.mxu0 0.0
      %2482 = vmatpush1.msra.mxu0 0.0
      %2483 = vmatprep.subr.mxu0 0.0
      %2484 = vmatpush1.msra.mxu0 0.0
      %2485 = vmatprep.subr.mxu0 0.0
      %2486 = vmatpush1.msra.mxu0 0.0
      %2487 = vmatprep.subr.mxu0 0.0
      %2488 = vmatpush1.msra.mxu0 0.0
      %2489 = vmatprep.mubr.f32.mxu0 0.0
      %2490 = vmatmul.mubr.f32.gmra.mrb[0].mxu0 %v1428
      %v2491 = vpop.f32.mrb[0].mxu0
      %v2492 = vadd.f32 0.0, %v2491
      %v2493 = vpop.f32.mrb[0].mxu0
      %2494 = vmatprep.mubr.f32.mxu0 0.0
      %2495 = vmatmul.mubr.f32.gmra.mrb[0].mxu0 %v1431
      %v2496 = vpop.f32.mrb[0].mxu0
      %v2497 = vadd.f32 0.0, %v2496
      %v2498 = vpop.f32.mrb[0].mxu0
      %2499 = vdwg.mxu0
      %v2500 = vsub.f32 %v2340, %v2415
      %v2501 = vsub.f32 %v2345, %v2420
      %v2502 = vsub.f32 %v2492, %v2340
      %v2503 = vsub.f32 %v2497, %v2345
      %v2504 = vsub.f32 %v2502, %v2415
      %v2505 = vsub.f32 %v2503, %v2420
      %s2506 = scalar_lea.vmem %s450, 16
      %2507 = vst.msk [vmem:[%s2506] sm:$0xff] %vm497, %v2500
      %2508 = vst.msk [vmem:[%s2506 + $0x8] sm:$0xff] %vm497, %v2501
      %s2509 = scalar_lea.vmem %s457, 16
      %2510 = vst.msk [vmem:[%s2509] sm:$0xff] %vm497, %v2504
      %2511 = vst.msk [vmem:[%s2509 + $0x8] sm:$0xff] %vm497, %v2505
      %s2512 = smul.u32 2, %s22
      %p2513 = scmp.lt.s32.totalorder %s2512, 7
      %s2514 = scalar_select %p2513, %s2512, 7
      %s2515 = smul.addr %s2514, 2
      %s2516 = smul.addr %s2515, 8
      %s2517 = scalar_lea.vmem %s9, %s2516
      %s2518 = smul.u32 2, %s22
      %p2519 = scmp.lt.s32.totalorder %s2518, 7
      %s2520 = scalar_select %p2519, %s2518, 7
      %s2521 = smul.addr %s2520, 2
      %s2522 = smul.addr %s2521, 8
      %s2523 = scalar_lea.vmem %s10, %s2522
      // Predicated region
      $region57: #{_forward_impl.1} parent=55 // pred_check
        %p2524 = pneg %p249
      $region58: #{_forward_impl.1} parent=55 // pred_check_branch
        %2526 = sbr.rel (%p2524) target = $region60
      $region59: #{_forward_impl.1} parent=55 // pred_region
        %s2527 = smul.u32 2, %s22
      $region60: #{_forward_impl.1} parent=55 // pred_fallthru
        _
      // Predicated region
      $region61: #{_forward_impl.1} parent=55 // pred_check
        %p2528 = pneg %p275
      $region62: #{_forward_impl.1} parent=55 // pred_check_branch
        %2530 = sbr.rel (%p2528) target = $region64
      $region63: #{_forward_impl.1} parent=55 // pred_region
        %s2531 = smul.u32 2, %s22
      $region64: #{_forward_impl.1} parent=55 // pred_fallthru
        _
    $region56: #{_forward_impl.1} parent=5 // pred_fallthru
      _
    %p2532 = scmp.le.s32.totalorder 2, %s17
    // Predicated region
    $region65: #{_forward_impl.1} parent=5 // pred_check
      %p2533 = pneg %p2532
    $region66: #{_forward_impl.1} parent=5 // pred_check_branch
      %2535 = sbr.rel (%p2533) target = $region68
    $region67: #{_forward_impl.1} parent=5 // pred_region
      %s2536 = ssub.s32 %s17, 2
      // Predicated region
      $region69: #{_forward_impl.1} parent=67 // pred_check
        %p2537 = pneg %p255
      $region70: #{_forward_impl.1} parent=67 // pred_check_branch
        %2539 = sbr.rel (%p2537) target = $region72
      $region71: #{_forward_impl.1} parent=67 // pred_region
        %s2540 = smul.u32 2, %s23
        %p2541 = scmp.lt.s32.totalorder %s2540, 7
        %s2542 = scalar_select %p2541, %s2540, 7
        %s2543 = smul.addr %s2542, 2
        %s2544 = smul.addr %s2543, 8
        %s2545 = scalar_lea.vmem %s9, %s2544
      $region72: #{_forward_impl.1} parent=67 // pred_fallthru
        _
      // Predicated region
      $region73: #{_forward_impl.1} parent=67 // pred_check
        %p2546 = pneg %p281
      $region74: #{_forward_impl.1} parent=67 // pred_check_branch
        %2548 = sbr.rel (%p2546) target = $region76
      $region75: #{_forward_impl.1} parent=67 // pred_region
        %s2549 = smul.u32 2, %s23
        %p2550 = scmp.lt.s32.totalorder %s2549, 7
        %s2551 = scalar_select %p2550, %s2549, 7
        %s2552 = smul.addr %s2551, 2
        %s2553 = smul.addr %s2552, 8
        %s2554 = scalar_lea.vmem %s10, %s2553
      $region76: #{_forward_impl.1} parent=67 // pred_fallthru
        _
    $region68: #{_forward_impl.1} parent=5 // pred_fallthru
      _
  $region6: #{_forward_impl.1} parent=0 // loop_footer
    %s21 = sadd.s32 1, %s17
  $region7: #{_forward_impl.1} parent=0 // loop_footer_branch
    %16 = sbr.rel target = $region3
  $region8: #{_forward_impl.1} parent=0 // loop_exit
    _

</llo_original>
